<compile_context>
chip_gen: v7x
topology: tpu7x:2x2x1
jax: 0.10.0
libtpu: 0.0.40
codegen_flags: <defaults>
</compile_context>

<pallas_src>
import functools

import jax
import jax.numpy as jnp
from jax.experimental import pallas as pl
from jax.experimental.pallas import tpu as pltpu

# ---- constants from the PyTorch module ----
THRESH = 2.0
LOG_SIG_MAX = 2.0
LOG_SIG_MIN = -20.0
V_NA, V_K, V_L, V_CA = 115.0, -12.0, 10.6, 120.0
GBAR_NA, GBAR_K, GBAR_L, GBAR_CA = 120.0, 36.0, 0.3, 0.1
ALPHA_CA, BETA_CA = 0.055, 0.94
ALPHA_HCA, BETA_HCA = 0.000457, 0.0065
N_UNIQUE = 5   # unique input time steps consumed by forward()
N_REP = 3      # each replicated 3x by the module
WINS = N_UNIQUE * N_REP


def gaussian_policy_kernel(x_ref, fcw_ref, fcb_ref, va_ref, vb_ref,
                           w1_ref, b1_ref, w2_ref, b2_ref, wf_ref, bf_ref,
                           out_ref, *, wins, rep):
    """One batch tile: HH membrane recurrence + fused mean/log_std heads.

    x_ref  : [n_unique, B_tile, Din]   5 unique input steps for this batch tile
    fcw_ref: [Din, H] fc weight with dt folded in;  fcb_ref: [1, H] fc bias * dt
    va_ref : [wins, H] per-step v multiplier  A_t = 1 - dt * sum_g(t)
    vb_ref : [wins, H] per-step v offset      B_t = dt * sum_g(t)*V_rev(t)
    w1/b1  : [H, 2H] / [1, 2H]  fused [linear1_1 | linear2_1], 1/wins folded into w1
    w2/b2  : [2H,2H] / [1, 2H]  block-diag(linear1_2, linear2_2)
    wf/bf  : [2H,Ap] / [1, Ap]  block-diag(mean_linear, log_std_linear), lane-padded
    out_ref: [B_tile, Ap]       raw [mean | log_std(unclipped) | zero-pad]
    """
    n_unique = wins // rep
    bt = x_ref.shape[1]
    H = fcw_ref.shape[1]
    mm_dtype = fcw_ref.dtype

    fcw = fcw_ref[...]
    fcb = fcb_ref[...]
    # I*dt for each unique input step.  x_ref[u] indexes the leading axis, so each
    # [B_tile, Din] slab is tile-aligned (no sublane shuffles).  One MXU pass each.
    i_dt = [jnp.dot(x_ref[u], fcw, preferred_element_type=jnp.float32) + fcb
            for u in range(n_unique)]

    v = jnp.zeros((bt, H), dtype=jnp.float32)
    spike_sum = jnp.zeros((bt, H), dtype=jnp.float32)

    # HH recurrence with the (input-independent) gating dynamics folded into A_t/B_t.
    # Each [1, H] table row is used exactly once, so there is nothing to hoist.
    for t in range(wins):
        v = v * va_ref[t:t + 1, :] + (i_dt[t // rep] + vb_ref[t:t + 1, :])
        # ActFun forward: (new_v - thresh) > 0  ->  1.0
        spike_sum = spike_sum + (v > THRESH).astype(jnp.float32)

    # torch.mean(spikes, dim=1): the 1/wins scale is folded into w1 in the wrapper,
    # so the raw spike count feeds the MXU directly.
    h1 = jnp.maximum(
        jnp.dot(spike_sum.astype(mm_dtype), w1_ref[...],
                preferred_element_type=jnp.float32) + b1_ref[...], 0.0)
    h2 = jnp.maximum(
        jnp.dot(h1.astype(mm_dtype), w2_ref[...],
                preferred_element_type=jnp.float32) + b2_ref[...], 0.0)
    out = jnp.dot(h2.astype(mm_dtype), wf_ref[...],
                  preferred_element_type=jnp.float32) + bf_ref[...]
    out_ref[...] = out.astype(out_ref.dtype)   # single unmasked lane-dense store


def _round_up(x, m):
    return ((x + m - 1) // m) * m


def _pick_batch_tile(b_pad, hidden):
    # Keep the ~8 live [B_tile, H] f32 arrays (v, spike_sum, 5x I*dt, temp) under
    # ~40 of the 64 vregs so the unrolled 15-step loop does not spill.
    lane_tiles = max(1, -(-hidden // 128))
    max_sublane_tiles = max(1, 40 // (8 * lane_tiles))
    return max(8, min(b_pad, 8 * max_sublane_tiles))


def _hh_gating_tables(hh, wins):
    """Precompute the input-independent HH gating trajectory -> A_t, B_t [wins, H]."""
    dt, a_n, b_n, a_m, b_m, a_h, b_h = (hh[i] for i in range(7))
    H = dt.shape[0]
    y = m = h = mca = hca = jnp.zeros((H,), jnp.float32)
    a_rows, b_rows = [], []
    for _ in range(wins):
        g_na = GBAR_NA * h * m ** 3
        g_k = GBAR_K * y ** 4
        g_ca = GBAR_CA * mca ** 2 * hca
        a_rows.append(1.0 - dt * (g_na + g_k + GBAR_L + g_ca))
        b_rows.append(dt * (g_na * V_NA + g_k * V_K + GBAR_L * V_L + g_ca * V_CA))
        # gating updates never see the input current -> exact precompute
        y = y + (a_n * (1.0 - y) - b_n * y) * dt
        m = m + (a_m * (1.0 - m) - b_m * m) * dt
        h = h + (a_h * (1.0 - h) - b_h * h) * dt
        mca = mca + (ALPHA_CA * (1.0 - mca) - BETA_CA * mca) * dt
        hca = hca + (ALPHA_HCA * (1.0 - hca) - BETA_HCA * hca) * dt
    return jnp.stack(a_rows, axis=0), jnp.stack(b_rows, axis=0)


def gaussian_policy_forward(state, params, *, matmul_dtype=jnp.float32):
    """state: [B, S>=5, num_inputs] f32 -> (mean, log_std), each [B, num_actions].

    Set matmul_dtype=jnp.bfloat16 on v6e/v7x to halve weight DMA/VMEM (f32 accumulation
    and f32 HH elementwise math are preserved).  Keep f32 on v5e.
    """
    B, S, Din = state.shape
    assert S >= N_UNIQUE
    H = params['fc_w'].shape[1]
    A = params['wm'].shape[1]

    # --- glue: 5 unique steps, time-major, batch padded to sublane multiple ---
    b_tile = _pick_batch_tile(_round_up(B, 8), H)
    b_pad = _round_up(_round_up(B, 8), b_tile)
    x5 = jnp.transpose(state[:, :N_UNIQUE, :], (1, 0, 2)).astype(jnp.float32)
    x5 = jnp.pad(x5, ((0, 0), (0, b_pad - B), (0, 0))).astype(matmul_dtype)  # [5,B_pad,Din]

    # --- fold dt into fc, precompute gating tables, fuse the two heads ---
    hh = params['hh'].astype(jnp.float32)
    dt = hh[0]
    fcw_dt = (params['fc_w'] * dt[None, :]).astype(matmul_dtype)
    fcb_dt = (params['fc_b'] * dt[None, :]).astype(jnp.float32)
    va_tab, vb_tab = _hh_gating_tables(hh, WINS)

    # fused first head, with the spike-mean 1/wins scale folded into the weight
    w1 = (jnp.concatenate([params['w11'], params['w21']], axis=1)
          * (1.0 / WINS)).astype(matmul_dtype)
    b1 = jnp.concatenate([params['b11'], params['b21']], axis=1).astype(jnp.float32)
    zhh = jnp.zeros((H, H), jnp.float32)
    w2 = jnp.block([[params['w12'], zhh], [zhh, params['w22']]]).astype(matmul_dtype)
    b2 = jnp.concatenate([params['b12'], params['b22']], axis=1).astype(jnp.float32)

    # fused final head, zero-padded to a 128-lane multiple for an unmasked output store
    a_pad = _round_up(2 * A, 128)
    zha = jnp.zeros((H, A), jnp.float32)
    wf = jnp.block([[params['wm'], zha], [zha, params['ws']]])
    wf = jnp.pad(wf, ((0, 0), (0, a_pad - 2 * A))).astype(matmul_dtype)
    bf = jnp.pad(jnp.concatenate([params['bm'], params['bs']], axis=1),
                 ((0, 0), (0, a_pad - 2 * A))).astype(jnp.float32)

    kernel = functools.partial(gaussian_policy_kernel, wins=WINS, rep=N_REP)
    grid = (b_pad // b_tile,)

    # Weights / tables: whole-array blocks with a constant index_map -> fetched once,
    # kept VMEM-resident across the batch grid (important for v7x's 64 MiB VMEM).
    def const(shape):
        n = len(shape)
        return pl.BlockSpec(shape, lambda i: (0,) * n)

    in_specs = [
        pl.BlockSpec((N_UNIQUE, b_tile, Din), lambda i: (0, i, 0)),   # x5
        const((Din, H)), const((1, H)),                               # fcw_dt, fcb_dt
        const((WINS, H)), const((WINS, H)),                           # va_tab, vb_tab
        const((H, 2 * H)), const((1, 2 * H)),                         # w1, b1
        const((2 * H, 2 * H)), const((1, 2 * H)),                     # w2, b2
        const((2 * H, a_pad)), const((1, a_pad)),                     # wf, bf
    ]
    out_spec = pl.BlockSpec((b_tile, a_pad), lambda i: (i, 0))

    raw = pl.pallas_call(
        kernel,
        out_shape=jax.ShapeDtypeStruct((b_pad, a_pad), jnp.float32),
        grid=grid,
        in_specs=in_specs,
        out_specs=out_spec,
        compiler_params=pltpu.CompilerParams(
            dimension_semantics=("parallel",)),
    )(x5, fcw_dt, fcb_dt, va_tab, vb_tab, w1, b1, w2, b2, wf, bf)

    raw = raw[:B, :2 * A]
    mean = raw[:, :A]
    log_std = jnp.clip(raw[:, A:], LOG_SIG_MIN, LOG_SIG_MAX)
    return mean, log_std


def init_params(key, num_inputs, num_actions, hidden_dim):
    """Deterministic synthetic init mirroring the PyTorch __init__ shapes."""
    def xavier(k, fan_in, fan_out):
        bound = (6.0 / (fan_in + fan_out)) ** 0.5
        return jax.random.uniform(k, (fan_in, fan_out), jnp.float32, -bound, bound)

    ks = jax.random.split(key, 14)
    H, A, Din = hidden_dim, num_actions, num_inputs

    dt  = 0.2 * jax.random.uniform(ks[7],  (H,), jnp.float32)   # 0.1 * 2 * rand
    a_n = 0.1 * jax.random.uniform(ks[8],  (H,), jnp.float32)
    b_n = 0.1 * jax.random.uniform(ks[9],  (H,), jnp.float32)
    a_m = 0.1 * jax.random.uniform(ks[10], (H,), jnp.float32)
    b_m = 0.1 * jax.random.uniform(ks[11], (H,), jnp.float32)
    a_h = 0.1 * jax.random.uniform(ks[12], (H,), jnp.float32)
    b_h = 0.1 * jax.random.uniform(ks[13], (H,), jnp.float32)

    return dict(
        fc_w=xavier(ks[0], Din, H), fc_b=jnp.zeros((1, H), jnp.float32),
        hh=jnp.stack([dt, a_n, b_n, a_m, b_m, a_h, b_h], axis=0),   # [7, H]
        w11=xavier(ks[1], H, H), b11=jnp.zeros((1, H), jnp.float32),
        w12=xavier(ks[2], H, H), b12=jnp.zeros((1, H), jnp.float32),
        w21=xavier(ks[3], H, H), b21=jnp.zeros((1, H), jnp.float32),
        w22=xavier(ks[4], H, H), b22=jnp.zeros((1, H), jnp.float32),
        wm=xavier(ks[5], H, A),  bm=jnp.zeros((1, A), jnp.float32),
        ws=xavier(ks[6], H, A),  bs=jnp.zeros((1, A), jnp.float32),
    )


if __name__ == "__main__":
    B, S, Din, H, A = 2, 8, 16, 32, 8
    key = jax.random.PRNGKey(0)
    k_state, k_params = jax.random.split(key)
    # Scale inputs up a bit so some HH neurons actually cross the spike threshold.
    state = 10.0 * jax.random.normal(k_state, (B, S, Din), jnp.float32)
    params = init_params(k_params, Din, A, H)

    fwd = jax.jit(gaussian_policy_forward)
    mean, log_std = fwd(state, params)
    jax.block_until_ready((mean, log_std))
    assert mean.shape == (B, A) and log_std.shape == (B, A)
    assert bool(jnp.all(jnp.isfinite(mean))) and bool(jnp.all(jnp.isfinite(log_std)))
    assert bool(jnp.all(log_std <= LOG_SIG_MAX)) and bool(jnp.all(log_std >= LOG_SIG_MIN))
    print("KERNEL_OK")
</pallas_src>

<mosaic_0001>
module attributes {stable_mosaic.version = 11 : i64} {
  func.func @gaussian_policy_kernel(%arg0: i32, %arg1: memref<5x8x16xf32, #tpu.memory_space<vmem>>, %arg2: memref<16x32xf32, #tpu.memory_space<vmem>>, %arg3: memref<1x32xf32, #tpu.memory_space<vmem>>, %arg4: memref<15x32xf32, #tpu.memory_space<vmem>>, %arg5: memref<15x32xf32, #tpu.memory_space<vmem>>, %arg6: memref<32x64xf32, #tpu.memory_space<vmem>>, %arg7: memref<1x64xf32, #tpu.memory_space<vmem>>, %arg8: memref<64x64xf32, #tpu.memory_space<vmem>>, %arg9: memref<1x64xf32, #tpu.memory_space<vmem>>, %arg10: memref<64x128xf32, #tpu.memory_space<vmem>>, %arg11: memref<1x128xf32, #tpu.memory_space<vmem>>, %arg12: memref<8x128xf32, #tpu.memory_space<vmem>>) attributes {dimension_semantics = [#tpu.dimension_semantics<parallel>], iteration_bounds = array<i64: 1>, scalar_prefetch = 0 : i64, scratch_operands = 0 : i64, tpu.core_type = #tpu.core_type<tc>, window_params = [{transform_indices = @transform_0, window_bounds = array<i64: 5, 8, 16>}, {pipeline_mode = #tpu.pipeline_mode<synchronous>, transform_indices = @transform_1, window_bounds = array<i64: 16, 32>}, {pipeline_mode = #tpu.pipeline_mode<synchronous>, transform_indices = @transform_2, window_bounds = array<i64: 1, 32>}, {pipeline_mode = #tpu.pipeline_mode<synchronous>, transform_indices = @transform_3, window_bounds = array<i64: 15, 32>}, {pipeline_mode = #tpu.pipeline_mode<synchronous>, transform_indices = @transform_4, window_bounds = array<i64: 15, 32>}, {pipeline_mode = #tpu.pipeline_mode<synchronous>, transform_indices = @transform_5, window_bounds = array<i64: 32, 64>}, {pipeline_mode = #tpu.pipeline_mode<synchronous>, transform_indices = @transform_6, window_bounds = array<i64: 1, 64>}, {pipeline_mode = #tpu.pipeline_mode<synchronous>, transform_indices = @transform_7, window_bounds = array<i64: 64, 64>}, {pipeline_mode = #tpu.pipeline_mode<synchronous>, transform_indices = @transform_8, window_bounds = array<i64: 1, 64>}, {pipeline_mode = #tpu.pipeline_mode<synchronous>, transform_indices = @transform_9, window_bounds = array<i64: 64, 128>}, {pipeline_mode = #tpu.pipeline_mode<synchronous>, transform_indices = @transform_10, window_bounds = array<i64: 1, 128>}, {transform_indices = @transform_11, window_bounds = array<i64: 8, 128>}]} {
    %c0 = arith.constant 0 : index
    %c0_0 = arith.constant 0 : index
    %0 = vector.load %arg2[%c0, %c0_0] : memref<16x32xf32, #tpu.memory_space<vmem>>, vector<16x32xf32>
    %c0_1 = arith.constant 0 : index
    %c0_2 = arith.constant 0 : index
    %1 = vector.load %arg3[%c0_1, %c0_2] : memref<1x32xf32, #tpu.memory_space<vmem>>, vector<1x32xf32>
    %c0_3 = arith.constant 0 : index
    %c0_4 = arith.constant 0 : index
    %c0_5 = arith.constant 0 : index
    %2 = vector.load %arg1[%c0_3, %c0_4, %c0_5] : memref<5x8x16xf32, #tpu.memory_space<vmem>>, vector<1x8x16xf32>
    %3 = vector.shape_cast %2 : vector<1x8x16xf32> to vector<8x16xf32>
    %cst = arith.constant dense<0.000000e+00> : vector<8x32xf32>
    %4 = tpu.matmul %3, %0, %cst {dimension_numbers = #tpu.dot_dimension_numbers<[1], [0], [0], [1], [0, 0, 1, 1], [], []>} : vector<8x16xf32>, vector<16x32xf32>, vector<8x32xf32> -> vector<8x32xf32>
    %5 = vector.broadcast %1 : vector<1x32xf32> to vector<8x32xf32>
    %6 = arith.addf %4, %5 : vector<8x32xf32>
    %c1 = arith.constant 1 : index
    %c0_6 = arith.constant 0 : index
    %c0_7 = arith.constant 0 : index
    %7 = vector.load %arg1[%c1, %c0_6, %c0_7] : memref<5x8x16xf32, #tpu.memory_space<vmem>>, vector<1x8x16xf32>
    %8 = vector.shape_cast %7 : vector<1x8x16xf32> to vector<8x16xf32>
    %cst_8 = arith.constant dense<0.000000e+00> : vector<8x32xf32>
    %9 = tpu.matmul %8, %0, %cst_8 {dimension_numbers = #tpu.dot_dimension_numbers<[1], [0], [0], [1], [0, 0, 1, 1], [], []>} : vector<8x16xf32>, vector<16x32xf32>, vector<8x32xf32> -> vector<8x32xf32>
    %10 = vector.broadcast %1 : vector<1x32xf32> to vector<8x32xf32>
    %11 = arith.addf %9, %10 : vector<8x32xf32>
    %c2 = arith.constant 2 : index
    %c0_9 = arith.constant 0 : index
    %c0_10 = arith.constant 0 : index
    %12 = vector.load %arg1[%c2, %c0_9, %c0_10] : memref<5x8x16xf32, #tpu.memory_space<vmem>>, vector<1x8x16xf32>
    %13 = vector.shape_cast %12 : vector<1x8x16xf32> to vector<8x16xf32>
    %cst_11 = arith.constant dense<0.000000e+00> : vector<8x32xf32>
    %14 = tpu.matmul %13, %0, %cst_11 {dimension_numbers = #tpu.dot_dimension_numbers<[1], [0], [0], [1], [0, 0, 1, 1], [], []>} : vector<8x16xf32>, vector<16x32xf32>, vector<8x32xf32> -> vector<8x32xf32>
    %15 = vector.broadcast %1 : vector<1x32xf32> to vector<8x32xf32>
    %16 = arith.addf %14, %15 : vector<8x32xf32>
    %c3 = arith.constant 3 : index
    %c0_12 = arith.constant 0 : index
    %c0_13 = arith.constant 0 : index
    %17 = vector.load %arg1[%c3, %c0_12, %c0_13] : memref<5x8x16xf32, #tpu.memory_space<vmem>>, vector<1x8x16xf32>
    %18 = vector.shape_cast %17 : vector<1x8x16xf32> to vector<8x16xf32>
    %cst_14 = arith.constant dense<0.000000e+00> : vector<8x32xf32>
    %19 = tpu.matmul %18, %0, %cst_14 {dimension_numbers = #tpu.dot_dimension_numbers<[1], [0], [0], [1], [0, 0, 1, 1], [], []>} : vector<8x16xf32>, vector<16x32xf32>, vector<8x32xf32> -> vector<8x32xf32>
    %20 = vector.broadcast %1 : vector<1x32xf32> to vector<8x32xf32>
    %21 = arith.addf %19, %20 : vector<8x32xf32>
    %c4 = arith.constant 4 : index
    %c0_15 = arith.constant 0 : index
    %c0_16 = arith.constant 0 : index
    %22 = vector.load %arg1[%c4, %c0_15, %c0_16] : memref<5x8x16xf32, #tpu.memory_space<vmem>>, vector<1x8x16xf32>
    %23 = vector.shape_cast %22 : vector<1x8x16xf32> to vector<8x16xf32>
    %cst_17 = arith.constant dense<0.000000e+00> : vector<8x32xf32>
    %24 = tpu.matmul %23, %0, %cst_17 {dimension_numbers = #tpu.dot_dimension_numbers<[1], [0], [0], [1], [0, 0, 1, 1], [], []>} : vector<8x16xf32>, vector<16x32xf32>, vector<8x32xf32> -> vector<8x32xf32>
    %25 = vector.broadcast %1 : vector<1x32xf32> to vector<8x32xf32>
    %26 = arith.addf %24, %25 : vector<8x32xf32>
    %cst_18 = arith.constant 0.000000e+00 : f32
    %27 = vector.broadcast %cst_18 : f32 to vector<8x32xf32>
    %cst_19 = arith.constant 0.000000e+00 : f32
    %28 = vector.broadcast %cst_19 : f32 to vector<8x32xf32>
    %c0_20 = arith.constant 0 : index
    %c0_21 = arith.constant 0 : index
    %29 = vector.load %arg4[%c0_20, %c0_21] : memref<15x32xf32, #tpu.memory_space<vmem>>, vector<1x32xf32>
    %30 = vector.broadcast %29 : vector<1x32xf32> to vector<8x32xf32>
    %31 = arith.mulf %27, %30 : vector<8x32xf32>
    %c0_22 = arith.constant 0 : index
    %c0_23 = arith.constant 0 : index
    %32 = vector.load %arg5[%c0_22, %c0_23] : memref<15x32xf32, #tpu.memory_space<vmem>>, vector<1x32xf32>
    %33 = vector.broadcast %32 : vector<1x32xf32> to vector<8x32xf32>
    %34 = arith.addf %6, %33 : vector<8x32xf32>
    %35 = arith.addf %31, %34 : vector<8x32xf32>
    %cst_24 = arith.constant 2.000000e+00 : f32
    %36 = vector.broadcast %cst_24 : f32 to vector<8x32xf32>
    %37 = arith.cmpf ogt, %35, %36 : vector<8x32xf32>
    %38 = arith.extui %37 : vector<8x32xi1> to vector<8x32xi32>
    %39 = arith.sitofp %38 : vector<8x32xi32> to vector<8x32xf32>
    %40 = arith.addf %28, %39 : vector<8x32xf32>
    %c1_25 = arith.constant 1 : index
    %c0_26 = arith.constant 0 : index
    %41 = vector.load %arg4[%c1_25, %c0_26] : memref<15x32xf32, #tpu.memory_space<vmem>>, vector<1x32xf32>
    %42 = vector.broadcast %41 : vector<1x32xf32> to vector<8x32xf32>
    %43 = arith.mulf %35, %42 : vector<8x32xf32>
    %c1_27 = arith.constant 1 : index
    %c0_28 = arith.constant 0 : index
    %44 = vector.load %arg5[%c1_27, %c0_28] : memref<15x32xf32, #tpu.memory_space<vmem>>, vector<1x32xf32>
    %45 = vector.broadcast %44 : vector<1x32xf32> to vector<8x32xf32>
    %46 = arith.addf %6, %45 : vector<8x32xf32>
    %47 = arith.addf %43, %46 : vector<8x32xf32>
    %cst_29 = arith.constant 2.000000e+00 : f32
    %48 = vector.broadcast %cst_29 : f32 to vector<8x32xf32>
    %49 = arith.cmpf ogt, %47, %48 : vector<8x32xf32>
    %50 = arith.extui %49 : vector<8x32xi1> to vector<8x32xi32>
    %51 = arith.sitofp %50 : vector<8x32xi32> to vector<8x32xf32>
    %52 = arith.addf %40, %51 : vector<8x32xf32>
    %c2_30 = arith.constant 2 : index
    %c0_31 = arith.constant 0 : index
    %53 = vector.load %arg4[%c2_30, %c0_31] : memref<15x32xf32, #tpu.memory_space<vmem>>, vector<1x32xf32>
    %54 = vector.broadcast %53 : vector<1x32xf32> to vector<8x32xf32>
    %55 = arith.mulf %47, %54 : vector<8x32xf32>
    %c2_32 = arith.constant 2 : index
    %c0_33 = arith.constant 0 : index
    %56 = vector.load %arg5[%c2_32, %c0_33] : memref<15x32xf32, #tpu.memory_space<vmem>>, vector<1x32xf32>
    %57 = vector.broadcast %56 : vector<1x32xf32> to vector<8x32xf32>
    %58 = arith.addf %6, %57 : vector<8x32xf32>
    %59 = arith.addf %55, %58 : vector<8x32xf32>
    %cst_34 = arith.constant 2.000000e+00 : f32
    %60 = vector.broadcast %cst_34 : f32 to vector<8x32xf32>
    %61 = arith.cmpf ogt, %59, %60 : vector<8x32xf32>
    %62 = arith.extui %61 : vector<8x32xi1> to vector<8x32xi32>
    %63 = arith.sitofp %62 : vector<8x32xi32> to vector<8x32xf32>
    %64 = arith.addf %52, %63 : vector<8x32xf32>
    %c3_35 = arith.constant 3 : index
    %c0_36 = arith.constant 0 : index
    %65 = vector.load %arg4[%c3_35, %c0_36] : memref<15x32xf32, #tpu.memory_space<vmem>>, vector<1x32xf32>
    %66 = vector.broadcast %65 : vector<1x32xf32> to vector<8x32xf32>
    %67 = arith.mulf %59, %66 : vector<8x32xf32>
    %c3_37 = arith.constant 3 : index
    %c0_38 = arith.constant 0 : index
    %68 = vector.load %arg5[%c3_37, %c0_38] : memref<15x32xf32, #tpu.memory_space<vmem>>, vector<1x32xf32>
    %69 = vector.broadcast %68 : vector<1x32xf32> to vector<8x32xf32>
    %70 = arith.addf %11, %69 : vector<8x32xf32>
    %71 = arith.addf %67, %70 : vector<8x32xf32>
    %cst_39 = arith.constant 2.000000e+00 : f32
    %72 = vector.broadcast %cst_39 : f32 to vector<8x32xf32>
    %73 = arith.cmpf ogt, %71, %72 : vector<8x32xf32>
    %74 = arith.extui %73 : vector<8x32xi1> to vector<8x32xi32>
    %75 = arith.sitofp %74 : vector<8x32xi32> to vector<8x32xf32>
    %76 = arith.addf %64, %75 : vector<8x32xf32>
    %c4_40 = arith.constant 4 : index
    %c0_41 = arith.constant 0 : index
    %77 = vector.load %arg4[%c4_40, %c0_41] : memref<15x32xf32, #tpu.memory_space<vmem>>, vector<1x32xf32>
    %78 = vector.broadcast %77 : vector<1x32xf32> to vector<8x32xf32>
    %79 = arith.mulf %71, %78 : vector<8x32xf32>
    %c4_42 = arith.constant 4 : index
    %c0_43 = arith.constant 0 : index
    %80 = vector.load %arg5[%c4_42, %c0_43] : memref<15x32xf32, #tpu.memory_space<vmem>>, vector<1x32xf32>
    %81 = vector.broadcast %80 : vector<1x32xf32> to vector<8x32xf32>
    %82 = arith.addf %11, %81 : vector<8x32xf32>
    %83 = arith.addf %79, %82 : vector<8x32xf32>
    %cst_44 = arith.constant 2.000000e+00 : f32
    %84 = vector.broadcast %cst_44 : f32 to vector<8x32xf32>
    %85 = arith.cmpf ogt, %83, %84 : vector<8x32xf32>
    %86 = arith.extui %85 : vector<8x32xi1> to vector<8x32xi32>
    %87 = arith.sitofp %86 : vector<8x32xi32> to vector<8x32xf32>
    %88 = arith.addf %76, %87 : vector<8x32xf32>
    %c5 = arith.constant 5 : index
    %c0_45 = arith.constant 0 : index
    %89 = vector.load %arg4[%c5, %c0_45] : memref<15x32xf32, #tpu.memory_space<vmem>>, vector<1x32xf32>
    %90 = vector.broadcast %89 : vector<1x32xf32> to vector<8x32xf32>
    %91 = arith.mulf %83, %90 : vector<8x32xf32>
    %c5_46 = arith.constant 5 : index
    %c0_47 = arith.constant 0 : index
    %92 = vector.load %arg5[%c5_46, %c0_47] : memref<15x32xf32, #tpu.memory_space<vmem>>, vector<1x32xf32>
    %93 = vector.broadcast %92 : vector<1x32xf32> to vector<8x32xf32>
    %94 = arith.addf %11, %93 : vector<8x32xf32>
    %95 = arith.addf %91, %94 : vector<8x32xf32>
    %cst_48 = arith.constant 2.000000e+00 : f32
    %96 = vector.broadcast %cst_48 : f32 to vector<8x32xf32>
    %97 = arith.cmpf ogt, %95, %96 : vector<8x32xf32>
    %98 = arith.extui %97 : vector<8x32xi1> to vector<8x32xi32>
    %99 = arith.sitofp %98 : vector<8x32xi32> to vector<8x32xf32>
    %100 = arith.addf %88, %99 : vector<8x32xf32>
    %c6 = arith.constant 6 : index
    %c0_49 = arith.constant 0 : index
    %101 = vector.load %arg4[%c6, %c0_49] : memref<15x32xf32, #tpu.memory_space<vmem>>, vector<1x32xf32>
    %102 = vector.broadcast %101 : vector<1x32xf32> to vector<8x32xf32>
    %103 = arith.mulf %95, %102 : vector<8x32xf32>
    %c6_50 = arith.constant 6 : index
    %c0_51 = arith.constant 0 : index
    %104 = vector.load %arg5[%c6_50, %c0_51] : memref<15x32xf32, #tpu.memory_space<vmem>>, vector<1x32xf32>
    %105 = vector.broadcast %104 : vector<1x32xf32> to vector<8x32xf32>
    %106 = arith.addf %16, %105 : vector<8x32xf32>
    %107 = arith.addf %103, %106 : vector<8x32xf32>
    %cst_52 = arith.constant 2.000000e+00 : f32
    %108 = vector.broadcast %cst_52 : f32 to vector<8x32xf32>
    %109 = arith.cmpf ogt, %107, %108 : vector<8x32xf32>
    %110 = arith.extui %109 : vector<8x32xi1> to vector<8x32xi32>
    %111 = arith.sitofp %110 : vector<8x32xi32> to vector<8x32xf32>
    %112 = arith.addf %100, %111 : vector<8x32xf32>
    %c7 = arith.constant 7 : index
    %c0_53 = arith.constant 0 : index
    %113 = vector.load %arg4[%c7, %c0_53] : memref<15x32xf32, #tpu.memory_space<vmem>>, vector<1x32xf32>
    %114 = vector.broadcast %113 : vector<1x32xf32> to vector<8x32xf32>
    %115 = arith.mulf %107, %114 : vector<8x32xf32>
    %c7_54 = arith.constant 7 : index
    %c0_55 = arith.constant 0 : index
    %116 = vector.load %arg5[%c7_54, %c0_55] : memref<15x32xf32, #tpu.memory_space<vmem>>, vector<1x32xf32>
    %117 = vector.broadcast %116 : vector<1x32xf32> to vector<8x32xf32>
    %118 = arith.addf %16, %117 : vector<8x32xf32>
    %119 = arith.addf %115, %118 : vector<8x32xf32>
    %cst_56 = arith.constant 2.000000e+00 : f32
    %120 = vector.broadcast %cst_56 : f32 to vector<8x32xf32>
    %121 = arith.cmpf ogt, %119, %120 : vector<8x32xf32>
    %122 = arith.extui %121 : vector<8x32xi1> to vector<8x32xi32>
    %123 = arith.sitofp %122 : vector<8x32xi32> to vector<8x32xf32>
    %124 = arith.addf %112, %123 : vector<8x32xf32>
    %c8 = arith.constant 8 : index
    %c0_57 = arith.constant 0 : index
    %125 = vector.load %arg4[%c8, %c0_57] : memref<15x32xf32, #tpu.memory_space<vmem>>, vector<1x32xf32>
    %126 = vector.broadcast %125 : vector<1x32xf32> to vector<8x32xf32>
    %127 = arith.mulf %119, %126 : vector<8x32xf32>
    %c8_58 = arith.constant 8 : index
    %c0_59 = arith.constant 0 : index
    %128 = vector.load %arg5[%c8_58, %c0_59] : memref<15x32xf32, #tpu.memory_space<vmem>>, vector<1x32xf32>
    %129 = vector.broadcast %128 : vector<1x32xf32> to vector<8x32xf32>
    %130 = arith.addf %16, %129 : vector<8x32xf32>
    %131 = arith.addf %127, %130 : vector<8x32xf32>
    %cst_60 = arith.constant 2.000000e+00 : f32
    %132 = vector.broadcast %cst_60 : f32 to vector<8x32xf32>
    %133 = arith.cmpf ogt, %131, %132 : vector<8x32xf32>
    %134 = arith.extui %133 : vector<8x32xi1> to vector<8x32xi32>
    %135 = arith.sitofp %134 : vector<8x32xi32> to vector<8x32xf32>
    %136 = arith.addf %124, %135 : vector<8x32xf32>
    %c9 = arith.constant 9 : index
    %c0_61 = arith.constant 0 : index
    %137 = vector.load %arg4[%c9, %c0_61] : memref<15x32xf32, #tpu.memory_space<vmem>>, vector<1x32xf32>
    %138 = vector.broadcast %137 : vector<1x32xf32> to vector<8x32xf32>
    %139 = arith.mulf %131, %138 : vector<8x32xf32>
    %c9_62 = arith.constant 9 : index
    %c0_63 = arith.constant 0 : index
    %140 = vector.load %arg5[%c9_62, %c0_63] : memref<15x32xf32, #tpu.memory_space<vmem>>, vector<1x32xf32>
    %141 = vector.broadcast %140 : vector<1x32xf32> to vector<8x32xf32>
    %142 = arith.addf %21, %141 : vector<8x32xf32>
    %143 = arith.addf %139, %142 : vector<8x32xf32>
    %cst_64 = arith.constant 2.000000e+00 : f32
    %144 = vector.broadcast %cst_64 : f32 to vector<8x32xf32>
    %145 = arith.cmpf ogt, %143, %144 : vector<8x32xf32>
    %146 = arith.extui %145 : vector<8x32xi1> to vector<8x32xi32>
    %147 = arith.sitofp %146 : vector<8x32xi32> to vector<8x32xf32>
    %148 = arith.addf %136, %147 : vector<8x32xf32>
    %c10 = arith.constant 10 : index
    %c0_65 = arith.constant 0 : index
    %149 = vector.load %arg4[%c10, %c0_65] : memref<15x32xf32, #tpu.memory_space<vmem>>, vector<1x32xf32>
    %150 = vector.broadcast %149 : vector<1x32xf32> to vector<8x32xf32>
    %151 = arith.mulf %143, %150 : vector<8x32xf32>
    %c10_66 = arith.constant 10 : index
    %c0_67 = arith.constant 0 : index
    %152 = vector.load %arg5[%c10_66, %c0_67] : memref<15x32xf32, #tpu.memory_space<vmem>>, vector<1x32xf32>
    %153 = vector.broadcast %152 : vector<1x32xf32> to vector<8x32xf32>
    %154 = arith.addf %21, %153 : vector<8x32xf32>
    %155 = arith.addf %151, %154 : vector<8x32xf32>
    %cst_68 = arith.constant 2.000000e+00 : f32
    %156 = vector.broadcast %cst_68 : f32 to vector<8x32xf32>
    %157 = arith.cmpf ogt, %155, %156 : vector<8x32xf32>
    %158 = arith.extui %157 : vector<8x32xi1> to vector<8x32xi32>
    %159 = arith.sitofp %158 : vector<8x32xi32> to vector<8x32xf32>
    %160 = arith.addf %148, %159 : vector<8x32xf32>
    %c11 = arith.constant 11 : index
    %c0_69 = arith.constant 0 : index
    %161 = vector.load %arg4[%c11, %c0_69] : memref<15x32xf32, #tpu.memory_space<vmem>>, vector<1x32xf32>
    %162 = vector.broadcast %161 : vector<1x32xf32> to vector<8x32xf32>
    %163 = arith.mulf %155, %162 : vector<8x32xf32>
    %c11_70 = arith.constant 11 : index
    %c0_71 = arith.constant 0 : index
    %164 = vector.load %arg5[%c11_70, %c0_71] : memref<15x32xf32, #tpu.memory_space<vmem>>, vector<1x32xf32>
    %165 = vector.broadcast %164 : vector<1x32xf32> to vector<8x32xf32>
    %166 = arith.addf %21, %165 : vector<8x32xf32>
    %167 = arith.addf %163, %166 : vector<8x32xf32>
    %cst_72 = arith.constant 2.000000e+00 : f32
    %168 = vector.broadcast %cst_72 : f32 to vector<8x32xf32>
    %169 = arith.cmpf ogt, %167, %168 : vector<8x32xf32>
    %170 = arith.extui %169 : vector<8x32xi1> to vector<8x32xi32>
    %171 = arith.sitofp %170 : vector<8x32xi32> to vector<8x32xf32>
    %172 = arith.addf %160, %171 : vector<8x32xf32>
    %c12 = arith.constant 12 : index
    %c0_73 = arith.constant 0 : index
    %173 = vector.load %arg4[%c12, %c0_73] : memref<15x32xf32, #tpu.memory_space<vmem>>, vector<1x32xf32>
    %174 = vector.broadcast %173 : vector<1x32xf32> to vector<8x32xf32>
    %175 = arith.mulf %167, %174 : vector<8x32xf32>
    %c12_74 = arith.constant 12 : index
    %c0_75 = arith.constant 0 : index
    %176 = vector.load %arg5[%c12_74, %c0_75] : memref<15x32xf32, #tpu.memory_space<vmem>>, vector<1x32xf32>
    %177 = vector.broadcast %176 : vector<1x32xf32> to vector<8x32xf32>
    %178 = arith.addf %26, %177 : vector<8x32xf32>
    %179 = arith.addf %175, %178 : vector<8x32xf32>
    %cst_76 = arith.constant 2.000000e+00 : f32
    %180 = vector.broadcast %cst_76 : f32 to vector<8x32xf32>
    %181 = arith.cmpf ogt, %179, %180 : vector<8x32xf32>
    %182 = arith.extui %181 : vector<8x32xi1> to vector<8x32xi32>
    %183 = arith.sitofp %182 : vector<8x32xi32> to vector<8x32xf32>
    %184 = arith.addf %172, %183 : vector<8x32xf32>
    %c13 = arith.constant 13 : index
    %c0_77 = arith.constant 0 : index
    %185 = vector.load %arg4[%c13, %c0_77] : memref<15x32xf32, #tpu.memory_space<vmem>>, vector<1x32xf32>
    %186 = vector.broadcast %185 : vector<1x32xf32> to vector<8x32xf32>
    %187 = arith.mulf %179, %186 : vector<8x32xf32>
    %c13_78 = arith.constant 13 : index
    %c0_79 = arith.constant 0 : index
    %188 = vector.load %arg5[%c13_78, %c0_79] : memref<15x32xf32, #tpu.memory_space<vmem>>, vector<1x32xf32>
    %189 = vector.broadcast %188 : vector<1x32xf32> to vector<8x32xf32>
    %190 = arith.addf %26, %189 : vector<8x32xf32>
    %191 = arith.addf %187, %190 : vector<8x32xf32>
    %cst_80 = arith.constant 2.000000e+00 : f32
    %192 = vector.broadcast %cst_80 : f32 to vector<8x32xf32>
    %193 = arith.cmpf ogt, %191, %192 : vector<8x32xf32>
    %194 = arith.extui %193 : vector<8x32xi1> to vector<8x32xi32>
    %195 = arith.sitofp %194 : vector<8x32xi32> to vector<8x32xf32>
    %196 = arith.addf %184, %195 : vector<8x32xf32>
    %c14 = arith.constant 14 : index
    %c0_81 = arith.constant 0 : index
    %197 = vector.load %arg4[%c14, %c0_81] : memref<15x32xf32, #tpu.memory_space<vmem>>, vector<1x32xf32>
    %198 = vector.broadcast %197 : vector<1x32xf32> to vector<8x32xf32>
    %199 = arith.mulf %191, %198 : vector<8x32xf32>
    %c14_82 = arith.constant 14 : index
    %c0_83 = arith.constant 0 : index
    %200 = vector.load %arg5[%c14_82, %c0_83] : memref<15x32xf32, #tpu.memory_space<vmem>>, vector<1x32xf32>
    %201 = vector.broadcast %200 : vector<1x32xf32> to vector<8x32xf32>
    %202 = arith.addf %26, %201 : vector<8x32xf32>
    %203 = arith.addf %199, %202 : vector<8x32xf32>
    %cst_84 = arith.constant 2.000000e+00 : f32
    %204 = vector.broadcast %cst_84 : f32 to vector<8x32xf32>
    %205 = arith.cmpf ogt, %203, %204 : vector<8x32xf32>
    %206 = arith.extui %205 : vector<8x32xi1> to vector<8x32xi32>
    %207 = arith.sitofp %206 : vector<8x32xi32> to vector<8x32xf32>
    %208 = arith.addf %196, %207 : vector<8x32xf32>
    %c0_85 = arith.constant 0 : index
    %c0_86 = arith.constant 0 : index
    %209 = vector.load %arg6[%c0_85, %c0_86] : memref<32x64xf32, #tpu.memory_space<vmem>>, vector<32x64xf32>
    %cst_87 = arith.constant dense<0.000000e+00> : vector<8x64xf32>
    %210 = tpu.matmul %208, %209, %cst_87 {dimension_numbers = #tpu.dot_dimension_numbers<[1], [0], [0], [1], [0, 0, 1, 1], [], []>} : vector<8x32xf32>, vector<32x64xf32>, vector<8x64xf32> -> vector<8x64xf32>
    %c0_88 = arith.constant 0 : index
    %c0_89 = arith.constant 0 : index
    %211 = vector.load %arg7[%c0_88, %c0_89] : memref<1x64xf32, #tpu.memory_space<vmem>>, vector<1x64xf32>
    %212 = vector.broadcast %211 : vector<1x64xf32> to vector<8x64xf32>
    %213 = arith.addf %210, %212 : vector<8x64xf32>
    %cst_90 = arith.constant 0.000000e+00 : f32
    %214 = vector.broadcast %cst_90 : f32 to vector<8x64xf32>
    %215 = arith.maximumf %213, %214 : vector<8x64xf32>
    %c0_91 = arith.constant 0 : index
    %c0_92 = arith.constant 0 : index
    %216 = vector.load %arg8[%c0_91, %c0_92] : memref<64x64xf32, #tpu.memory_space<vmem>>, vector<64x64xf32>
    %cst_93 = arith.constant dense<0.000000e+00> : vector<8x64xf32>
    %217 = tpu.matmul %215, %216, %cst_93 {dimension_numbers = #tpu.dot_dimension_numbers<[1], [0], [0], [1], [0, 0, 1, 1], [], []>} : vector<8x64xf32>, vector<64x64xf32>, vector<8x64xf32> -> vector<8x64xf32>
    %c0_94 = arith.constant 0 : index
    %c0_95 = arith.constant 0 : index
    %218 = vector.load %arg9[%c0_94, %c0_95] : memref<1x64xf32, #tpu.memory_space<vmem>>, vector<1x64xf32>
    %219 = vector.broadcast %218 : vector<1x64xf32> to vector<8x64xf32>
    %220 = arith.addf %217, %219 : vector<8x64xf32>
    %cst_96 = arith.constant 0.000000e+00 : f32
    %221 = vector.broadcast %cst_96 : f32 to vector<8x64xf32>
    %222 = arith.maximumf %220, %221 : vector<8x64xf32>
    %c0_97 = arith.constant 0 : index
    %c0_98 = arith.constant 0 : index
    %223 = vector.load %arg10[%c0_97, %c0_98] : memref<64x128xf32, #tpu.memory_space<vmem>>, vector<64x128xf32>
    %cst_99 = arith.constant dense<0.000000e+00> : vector<8x128xf32>
    %224 = tpu.matmul %222, %223, %cst_99 {dimension_numbers = #tpu.dot_dimension_numbers<[1], [0], [0], [1], [0, 0, 1, 1], [], []>} : vector<8x64xf32>, vector<64x128xf32>, vector<8x128xf32> -> vector<8x128xf32>
    %c0_100 = arith.constant 0 : index
    %c0_101 = arith.constant 0 : index
    %225 = vector.load %arg11[%c0_100, %c0_101] : memref<1x128xf32, #tpu.memory_space<vmem>>, vector<1x128xf32>
    %226 = vector.broadcast %225 : vector<1x128xf32> to vector<8x128xf32>
    %227 = arith.addf %224, %226 : vector<8x128xf32>
    %c0_102 = arith.constant 0 : index
    %c0_103 = arith.constant 0 : index
    %228 = vector.load %arg12[%c0_102, %c0_103] : memref<8x128xf32, #tpu.memory_space<vmem>>, vector<8x128xf32>
    tpu.vector_store %arg12[%c0_102, %c0_103], %227 {strides = array<i32>} : memref<8x128xf32, #tpu.memory_space<vmem>>, vector<8x128xf32>,
    return
  }
  func.func @transform_0(%arg0: i32) -> (i32, i32, i32) {
    %c0_i32 = arith.constant 0 : i32
    %c0_i32_0 = arith.constant 0 : i32
    %c0_i32_1 = arith.constant 0 : i32
    return %c0_i32, %arg0, %c0_i32_0 : i32, i32, i32
  }
  func.func @transform_1(%arg0: i32) -> (i32, i32) {
    %c0_i32 = arith.constant 0 : i32
    %c0_i32_0 = arith.constant 0 : i32
    %c0_i32_1 = arith.constant 0 : i32
    return %c0_i32, %c0_i32_0 : i32, i32
  }
  func.func @transform_2(%arg0: i32) -> (i32, i32) {
    %c0_i32 = arith.constant 0 : i32
    %c0_i32_0 = arith.constant 0 : i32
    %c0_i32_1 = arith.constant 0 : i32
    return %c0_i32, %c0_i32_0 : i32, i32
  }
  func.func @transform_3(%arg0: i32) -> (i32, i32) {
    %c0_i32 = arith.constant 0 : i32
    %c0_i32_0 = arith.constant 0 : i32
    %c0_i32_1 = arith.constant 0 : i32
    return %c0_i32, %c0_i32_0 : i32, i32
  }
  func.func @transform_4(%arg0: i32) -> (i32, i32) {
    %c0_i32 = arith.constant 0 : i32
    %c0_i32_0 = arith.constant 0 : i32
    %c0_i32_1 = arith.constant 0 : i32
    return %c0_i32, %c0_i32_0 : i32, i32
  }
  func.func @transform_5(%arg0: i32) -> (i32, i32) {
    %c0_i32 = arith.constant 0 : i32
    %c0_i32_0 = arith.constant 0 : i32
    %c0_i32_1 = arith.constant 0 : i32
    return %c0_i32, %c0_i32_0 : i32, i32
  }
  func.func @transform_6(%arg0: i32) -> (i32, i32) {
    %c0_i32 = arith.constant 0 : i32
    %c0_i32_0 = arith.constant 0 : i32
    %c0_i32_1 = arith.constant 0 : i32
    return %c0_i32, %c0_i32_0 : i32, i32
  }
  func.func @transform_7(%arg0: i32) -> (i32, i32) {
    %c0_i32 = arith.constant 0 : i32
    %c0_i32_0 = arith.constant 0 : i32
    %c0_i32_1 = arith.constant 0 : i32
    return %c0_i32, %c0_i32_0 : i32, i32
  }
  func.func @transform_8(%arg0: i32) -> (i32, i32) {
    %c0_i32 = arith.constant 0 : i32
    %c0_i32_0 = arith.constant 0 : i32
    %c0_i32_1 = arith.constant 0 : i32
    return %c0_i32, %c0_i32_0 : i32, i32
  }
  func.func @transform_9(%arg0: i32) -> (i32, i32) {
    %c0_i32 = arith.constant 0 : i32
    %c0_i32_0 = arith.constant 0 : i32
    %c0_i32_1 = arith.constant 0 : i32
    return %c0_i32, %c0_i32_0 : i32, i32
  }
  func.func @transform_10(%arg0: i32) -> (i32, i32) {
    %c0_i32 = arith.constant 0 : i32
    %c0_i32_0 = arith.constant 0 : i32
    %c0_i32_1 = arith.constant 0 : i32
    return %c0_i32, %c0_i32_0 : i32, i32
  }
  func.func @transform_11(%arg0: i32) -> (i32, i32) {
    %c0_i32 = arith.constant 0 : i32
    %c0_i32_0 = arith.constant 0 : i32
    return %arg0, %c0_i32 : i32, i32
  }
}

</mosaic_0001>

<llo_original>
// kernel: gaussian_policy_forward.1
$region0: #{gaussian_policy_forward.1}
  #allocation0 [shape = 'u32[]', space=smem, size = 0x4, offset = 0x4, fixed_abs, tag = 'smem constant byte address 0x4 - core index']
  #allocation1 [shape = 'u32[144,128]{1,0:T(1,128)}', space=vmem, size = 0x12000, scoped, tag = 'internal scratch']
  %s0 = inlined_call_operand.vmem [shape: f32[5,8,16], index: 0, kind: input, shape index: {}]
  %s1 = inlined_call_operand.vmem [shape: f32[16,32], index: 1, kind: input, shape index: {}]
  %s2 = inlined_call_operand.vmem [shape: f32[1,32], index: 2, kind: input, shape index: {}]
  %s3 = inlined_call_operand.vmem [shape: f32[15,32], index: 3, kind: input, shape index: {}]
  %s4 = inlined_call_operand.vmem [shape: f32[15,32], index: 4, kind: input, shape index: {}]
  %s5 = inlined_call_operand.vmem [shape: f32[32,64], index: 5, kind: input, shape index: {}]
  %s6 = inlined_call_operand.vmem [shape: f32[1,64], index: 6, kind: input, shape index: {}]
  %s7 = inlined_call_operand.vmem [shape: f32[64,64], index: 7, kind: input, shape index: {}]
  %s8 = inlined_call_operand.vmem [shape: f32[1,64], index: 8, kind: input, shape index: {}]
  %s9 = inlined_call_operand.vmem [shape: f32[64,128], index: 9, kind: input, shape index: {}]
  %s10 = inlined_call_operand.vmem [shape: f32[1,128], index: 10, kind: input, shape index: {}]
  %s11 = inlined_call_operand.vmem [shape: f32[8,128], index: 11, kind: output, shape index: {}]
  %s12 = sld [smem:[#allocation0]]
  $region54: #{gaussian_policy_forward.1} parent=0
    _
  %s14 = ssub.s32 1, %s12
  %s15 = scalar_select 0, %s14, %s12
  // Predicated region
  $region2: #{gaussian_policy_forward.1} parent=0 // pred_check
    _
  $region3: #{gaussian_policy_forward.1} parent=0 // pred_check_branch
    %17 = sbr.rel (0) target = $region5
  $region4: #{gaussian_policy_forward.1} parent=0 // pred_region
    _
  $region5: #{gaussian_policy_forward.1} parent=0 // pred_fallthru
    _
  // Predicated region
  $region6: #{gaussian_policy_forward.1} parent=0 // pred_check
    _
  $region7: #{gaussian_policy_forward.1} parent=0 // pred_check_branch
    %19 = sbr.rel (0) target = $region9
  $region8: #{gaussian_policy_forward.1} parent=0 // pred_region
    _
  $region9: #{gaussian_policy_forward.1} parent=0 // pred_fallthru
    _
  // Predicated region
  $region10: #{gaussian_policy_forward.1} parent=0 // pred_check
    _
  $region11: #{gaussian_policy_forward.1} parent=0 // pred_check_branch
    %21 = sbr.rel (0) target = $region13
  $region12: #{gaussian_policy_forward.1} parent=0 // pred_region
    _
  $region13: #{gaussian_policy_forward.1} parent=0 // pred_fallthru
    _
  // Predicated region
  $region14: #{gaussian_policy_forward.1} parent=0 // pred_check
    _
  $region15: #{gaussian_policy_forward.1} parent=0 // pred_check_branch
    %23 = sbr.rel (0) target = $region17
  $region16: #{gaussian_policy_forward.1} parent=0 // pred_region
    _
  $region17: #{gaussian_policy_forward.1} parent=0 // pred_fallthru
    _
  // Predicated region
  $region18: #{gaussian_policy_forward.1} parent=0 // pred_check
    _
  $region19: #{gaussian_policy_forward.1} parent=0 // pred_check_branch
    %25 = sbr.rel (0) target = $region21
  $region20: #{gaussian_policy_forward.1} parent=0 // pred_region
    _
  $region21: #{gaussian_policy_forward.1} parent=0 // pred_fallthru
    _
  // Predicated region
  $region22: #{gaussian_policy_forward.1} parent=0 // pred_check
    _
  $region23: #{gaussian_policy_forward.1} parent=0 // pred_check_branch
    %27 = sbr.rel (0) target = $region25
  $region24: #{gaussian_policy_forward.1} parent=0 // pred_region
    _
  $region25: #{gaussian_policy_forward.1} parent=0 // pred_fallthru
    _
  // Predicated region
  $region26: #{gaussian_policy_forward.1} parent=0 // pred_check
    _
  $region27: #{gaussian_policy_forward.1} parent=0 // pred_check_branch
    %29 = sbr.rel (0) target = $region29
  $region28: #{gaussian_policy_forward.1} parent=0 // pred_region
    _
  $region29: #{gaussian_policy_forward.1} parent=0 // pred_fallthru
    _
  // Predicated region
  $region30: #{gaussian_policy_forward.1} parent=0 // pred_check
    _
  $region31: #{gaussian_policy_forward.1} parent=0 // pred_check_branch
    %31 = sbr.rel (0) target = $region33
  $region32: #{gaussian_policy_forward.1} parent=0 // pred_region
    _
  $region33: #{gaussian_policy_forward.1} parent=0 // pred_fallthru
    _
  // Predicated region
  $region34: #{gaussian_policy_forward.1} parent=0 // pred_check
    _
  $region35: #{gaussian_policy_forward.1} parent=0 // pred_check_branch
    %33 = sbr.rel (0) target = $region37
  $region36: #{gaussian_policy_forward.1} parent=0 // pred_region
    _
  $region37: #{gaussian_policy_forward.1} parent=0 // pred_fallthru
    _
  // Predicated region
  $region38: #{gaussian_policy_forward.1} parent=0 // pred_check
    _
  $region39: #{gaussian_policy_forward.1} parent=0 // pred_check_branch
    %35 = sbr.rel (0) target = $region41
  $region40: #{gaussian_policy_forward.1} parent=0 // pred_region
    _
  $region41: #{gaussian_policy_forward.1} parent=0 // pred_fallthru
    _
  // Predicated region
  $region42: #{gaussian_policy_forward.1} parent=0 // pred_check
    _
  $region43: #{gaussian_policy_forward.1} parent=0 // pred_check_branch
    %37 = sbr.rel (0) target = $region45
  $region44: #{gaussian_policy_forward.1} parent=0 // pred_region
    _
  $region45: #{gaussian_policy_forward.1} parent=0 // pred_fallthru
    _
  %v38 = vld [vmem:[%s1] sm:$0xff]
  %v39 = vld [vmem:[%s1 + $0x8] sm:$0xff]
  %v40 = vld [vmem:[%s2] sm:$0x1]
  %v41 = vld [vmem:[%s0] sm:$0xff]
  %v43 = vlaneseq
  %v44 = vshrl.u32 %v43, 7
  %v45 = vsub.s32 0, %v44
  %v46 = vrot.slane %v40, %v45
  %vm48 = vcmask 130048
  %v50 = vsel %vm48, %v41, 0
  %52 = vmatprep.subr.mxu0 0.0
  %53 = vmatpush1.msra.mxu0 %v38
  %54 = vmatprep.subr.mxu0 0.0
  %55 = vmatpush1.msra.mxu0 %v39
  %56 = vmatprep.subr.mxu0 0.0
  %57 = vmatpush1.msra.mxu0 0.0
  %58 = vmatprep.subr.mxu0 0.0
  %59 = vmatpush1.msra.mxu0 0.0
  %60 = vmatprep.subr.mxu0 0.0
  %61 = vmatpush1.msra.mxu0 0.0
  %62 = vmatprep.subr.mxu0 0.0
  %63 = vmatpush1.msra.mxu0 0.0
  %64 = vmatprep.subr.mxu0 0.0
  %65 = vmatpush1.msra.mxu0 0.0
  %66 = vmatprep.subr.mxu0 0.0
  %67 = vmatpush1.msra.mxu0 0.0
  %68 = vmatprep.subr.mxu0 0.0
  %69 = vmatpush1.msra.mxu0 0.0
  %70 = vmatprep.subr.mxu0 0.0
  %71 = vmatpush1.msra.mxu0 0.0
  %72 = vmatprep.subr.mxu0 0.0
  %73 = vmatpush1.msra.mxu0 0.0
  %74 = vmatprep.subr.mxu0 0.0
  %75 = vmatpush1.msra.mxu0 0.0
  %76 = vmatprep.subr.mxu0 0.0
  %77 = vmatpush1.msra.mxu0 0.0
  %78 = vmatprep.subr.mxu0 0.0
  %79 = vmatpush1.msra.mxu0 0.0
  %80 = vmatprep.subr.mxu0 0.0
  %81 = vmatpush1.msra.mxu0 0.0
  %82 = vmatprep.subr.mxu0 0.0
  %83 = vmatpush1.msra.mxu0 0.0
  %84 = vmatprep.subr.mxu0 0.0
  %85 = vmatpush1.msra.mxu0 0.0
  %86 = vmatprep.subr.mxu0 0.0
  %87 = vmatpush1.msra.mxu0 0.0
  %88 = vmatprep.subr.mxu0 0.0
  %89 = vmatpush1.msra.mxu0 0.0
  %90 = vmatprep.subr.mxu0 0.0
  %91 = vmatpush1.msra.mxu0 0.0
  %92 = vmatprep.subr.mxu0 0.0
  %93 = vmatpush1.msra.mxu0 0.0
  %94 = vmatprep.subr.mxu0 0.0
  %95 = vmatpush1.msra.mxu0 0.0
  %96 = vmatprep.subr.mxu0 0.0
  %97 = vmatpush1.msra.mxu0 0.0
  %98 = vmatprep.subr.mxu0 0.0
  %99 = vmatpush1.msra.mxu0 0.0
  %100 = vmatprep.subr.mxu0 0.0
  %101 = vmatpush1.msra.mxu0 0.0
  %102 = vmatprep.subr.mxu0 0.0
  %103 = vmatpush1.msra.mxu0 0.0
  %104 = vmatprep.subr.mxu0 0.0
  %105 = vmatpush1.msra.mxu0 0.0
  %106 = vmatprep.subr.mxu0 0.0
  %107 = vmatpush1.msra.mxu0 0.0
  %108 = vmatprep.subr.mxu0 0.0
  %109 = vmatpush1.msra.mxu0 0.0
  %110 = vmatprep.subr.mxu0 0.0
  %111 = vmatpush1.msra.mxu0 0.0
  %112 = vmatprep.subr.mxu0 0.0
  %113 = vmatpush1.msra.mxu0 0.0
  %114 = vmatprep.subr.mxu0 0.0
  %115 = vmatpush1.msra.mxu0 0.0
  %116 = vmatprep.mubr.f32.mxu0 0.0
  %117 = vmatmul.mubr.f32.gmra.mrb[0].mxu0 %v50
  %v118 = vpop.f32.mrb[0].mxu0
  %v119 = vadd.f32 %v46, %v118
  %v120 = vpop.f32.mrb[0].mxu0
  %121 = vdwg.mxu0
  %s122 = scalar_lea.vmem %s0, 8
  %v123 = vld [vmem:[%s122] sm:$0xff]
  %v125 = vsel %vm48, %v123, 0
  %127 = vmatprep.subr.mxu0 0.0
  %128 = vmatpush1.msra.mxu0 %v38
  %129 = vmatprep.subr.mxu0 0.0
  %130 = vmatpush1.msra.mxu0 %v39
  %131 = vmatprep.subr.mxu0 0.0
  %132 = vmatpush1.msra.mxu0 0.0
  %133 = vmatprep.subr.mxu0 0.0
  %134 = vmatpush1.msra.mxu0 0.0
  %135 = vmatprep.subr.mxu0 0.0
  %136 = vmatpush1.msra.mxu0 0.0
  %137 = vmatprep.subr.mxu0 0.0
  %138 = vmatpush1.msra.mxu0 0.0
  %139 = vmatprep.subr.mxu0 0.0
  %140 = vmatpush1.msra.mxu0 0.0
  %141 = vmatprep.subr.mxu0 0.0
  %142 = vmatpush1.msra.mxu0 0.0
  %143 = vmatprep.subr.mxu0 0.0
  %144 = vmatpush1.msra.mxu0 0.0
  %145 = vmatprep.subr.mxu0 0.0
  %146 = vmatpush1.msra.mxu0 0.0
  %147 = vmatprep.subr.mxu0 0.0
  %148 = vmatpush1.msra.mxu0 0.0
  %149 = vmatprep.subr.mxu0 0.0
  %150 = vmatpush1.msra.mxu0 0.0
  %151 = vmatprep.subr.mxu0 0.0
  %152 = vmatpush1.msra.mxu0 0.0
  %153 = vmatprep.subr.mxu0 0.0
  %154 = vmatpush1.msra.mxu0 0.0
  %155 = vmatprep.subr.mxu0 0.0
  %156 = vmatpush1.msra.mxu0 0.0
  %157 = vmatprep.subr.mxu0 0.0
  %158 = vmatpush1.msra.mxu0 0.0
  %159 = vmatprep.subr.mxu0 0.0
  %160 = vmatpush1.msra.mxu0 0.0
  %161 = vmatprep.subr.mxu0 0.0
  %162 = vmatpush1.msra.mxu0 0.0
  %163 = vmatprep.subr.mxu0 0.0
  %164 = vmatpush1.msra.mxu0 0.0
  %165 = vmatprep.subr.mxu0 0.0
  %166 = vmatpush1.msra.mxu0 0.0
  %167 = vmatprep.subr.mxu0 0.0
  %168 = vmatpush1.msra.mxu0 0.0
  %169 = vmatprep.subr.mxu0 0.0
  %170 = vmatpush1.msra.mxu0 0.0
  %171 = vmatprep.subr.mxu0 0.0
  %172 = vmatpush1.msra.mxu0 0.0
  %173 = vmatprep.subr.mxu0 0.0
  %174 = vmatpush1.msra.mxu0 0.0
  %175 = vmatprep.subr.mxu0 0.0
  %176 = vmatpush1.msra.mxu0 0.0
  %177 = vmatprep.subr.mxu0 0.0
  %178 = vmatpush1.msra.mxu0 0.0
  %179 = vmatprep.subr.mxu0 0.0
  %180 = vmatpush1.msra.mxu0 0.0
  %181 = vmatprep.subr.mxu0 0.0
  %182 = vmatpush1.msra.mxu0 0.0
  %183 = vmatprep.subr.mxu0 0.0
  %184 = vmatpush1.msra.mxu0 0.0
  %185 = vmatprep.subr.mxu0 0.0
  %186 = vmatpush1.msra.mxu0 0.0
  %187 = vmatprep.subr.mxu0 0.0
  %188 = vmatpush1.msra.mxu0 0.0
  %189 = vmatprep.subr.mxu0 0.0
  %190 = vmatpush1.msra.mxu0 0.0
  %191 = vmatprep.mubr.f32.mxu0 0.0
  %192 = vmatmul.mubr.f32.gmra.mrb[0].mxu0 %v125
  %v193 = vpop.f32.mrb[0].mxu0
  %v194 = vadd.f32 %v46, %v193
  %v195 = vpop.f32.mrb[0].mxu0
  %196 = vdwg.mxu0
  %s197 = scalar_lea.vmem %s0, 16
  %v198 = vld [vmem:[%s197] sm:$0xff]
  %v200 = vsel %vm48, %v198, 0
  %202 = vmatprep.subr.mxu0 0.0
  %203 = vmatpush1.msra.mxu0 %v38
  %204 = vmatprep.subr.mxu0 0.0
  %205 = vmatpush1.msra.mxu0 %v39
  %206 = vmatprep.subr.mxu0 0.0
  %207 = vmatpush1.msra.mxu0 0.0
  %208 = vmatprep.subr.mxu0 0.0
  %209 = vmatpush1.msra.mxu0 0.0
  %210 = vmatprep.subr.mxu0 0.0
  %211 = vmatpush1.msra.mxu0 0.0
  %212 = vmatprep.subr.mxu0 0.0
  %213 = vmatpush1.msra.mxu0 0.0
  %214 = vmatprep.subr.mxu0 0.0
  %215 = vmatpush1.msra.mxu0 0.0
  %216 = vmatprep.subr.mxu0 0.0
  %217 = vmatpush1.msra.mxu0 0.0
  %218 = vmatprep.subr.mxu0 0.0
  %219 = vmatpush1.msra.mxu0 0.0
  %220 = vmatprep.subr.mxu0 0.0
  %221 = vmatpush1.msra.mxu0 0.0
  %222 = vmatprep.subr.mxu0 0.0
  %223 = vmatpush1.msra.mxu0 0.0
  %224 = vmatprep.subr.mxu0 0.0
  %225 = vmatpush1.msra.mxu0 0.0
  %226 = vmatprep.subr.mxu0 0.0
  %227 = vmatpush1.msra.mxu0 0.0
  %228 = vmatprep.subr.mxu0 0.0
  %229 = vmatpush1.msra.mxu0 0.0
  %230 = vmatprep.subr.mxu0 0.0
  %231 = vmatpush1.msra.mxu0 0.0
  %232 = vmatprep.subr.mxu0 0.0
  %233 = vmatpush1.msra.mxu0 0.0
  %234 = vmatprep.subr.mxu0 0.0
  %235 = vmatpush1.msra.mxu0 0.0
  %236 = vmatprep.subr.mxu0 0.0
  %237 = vmatpush1.msra.mxu0 0.0
  %238 = vmatprep.subr.mxu0 0.0
  %239 = vmatpush1.msra.mxu0 0.0
  %240 = vmatprep.subr.mxu0 0.0
  %241 = vmatpush1.msra.mxu0 0.0
  %242 = vmatprep.subr.mxu0 0.0
  %243 = vmatpush1.msra.mxu0 0.0
  %244 = vmatprep.subr.mxu0 0.0
  %245 = vmatpush1.msra.mxu0 0.0
  %246 = vmatprep.subr.mxu0 0.0
  %247 = vmatpush1.msra.mxu0 0.0
  %248 = vmatprep.subr.mxu0 0.0
  %249 = vmatpush1.msra.mxu0 0.0
  %250 = vmatprep.subr.mxu0 0.0
  %251 = vmatpush1.msra.mxu0 0.0
  %252 = vmatprep.subr.mxu0 0.0
  %253 = vmatpush1.msra.mxu0 0.0
  %254 = vmatprep.subr.mxu0 0.0
  %255 = vmatpush1.msra.mxu0 0.0
  %256 = vmatprep.subr.mxu0 0.0
  %257 = vmatpush1.msra.mxu0 0.0
  %258 = vmatprep.subr.mxu0 0.0
  %259 = vmatpush1.msra.mxu0 0.0
  %260 = vmatprep.subr.mxu0 0.0
  %261 = vmatpush1.msra.mxu0 0.0
  %262 = vmatprep.subr.mxu0 0.0
  %263 = vmatpush1.msra.mxu0 0.0
  %264 = vmatprep.subr.mxu0 0.0
  %265 = vmatpush1.msra.mxu0 0.0
  %266 = vmatprep.mubr.f32.mxu0 0.0
  %267 = vmatmul.mubr.f32.gmra.mrb[0].mxu0 %v200
  %v268 = vpop.f32.mrb[0].mxu0
  %v269 = vadd.f32 %v46, %v268
  %v270 = vpop.f32.mrb[0].mxu0
  %271 = vdwg.mxu0
  %s272 = scalar_lea.vmem %s0, 24
  %v273 = vld [vmem:[%s272] sm:$0xff]
  %v275 = vsel %vm48, %v273, 0
  %277 = vmatprep.subr.mxu0 0.0
  %278 = vmatpush1.msra.mxu0 %v38
  %279 = vmatprep.subr.mxu0 0.0
  %280 = vmatpush1.msra.mxu0 %v39
  %281 = vmatprep.subr.mxu0 0.0
  %282 = vmatpush1.msra.mxu0 0.0
  %283 = vmatprep.subr.mxu0 0.0
  %284 = vmatpush1.msra.mxu0 0.0
  %285 = vmatprep.subr.mxu0 0.0
  %286 = vmatpush1.msra.mxu0 0.0
  %287 = vmatprep.subr.mxu0 0.0
  %288 = vmatpush1.msra.mxu0 0.0
  %289 = vmatprep.subr.mxu0 0.0
  %290 = vmatpush1.msra.mxu0 0.0
  %291 = vmatprep.subr.mxu0 0.0
  %292 = vmatpush1.msra.mxu0 0.0
  %293 = vmatprep.subr.mxu0 0.0
  %294 = vmatpush1.msra.mxu0 0.0
  %295 = vmatprep.subr.mxu0 0.0
  %296 = vmatpush1.msra.mxu0 0.0
  %297 = vmatprep.subr.mxu0 0.0
  %298 = vmatpush1.msra.mxu0 0.0
  %299 = vmatprep.subr.mxu0 0.0
  %300 = vmatpush1.msra.mxu0 0.0
  %301 = vmatprep.subr.mxu0 0.0
  %302 = vmatpush1.msra.mxu0 0.0
  %303 = vmatprep.subr.mxu0 0.0
  %304 = vmatpush1.msra.mxu0 0.0
  %305 = vmatprep.subr.mxu0 0.0
  %306 = vmatpush1.msra.mxu0 0.0
  %307 = vmatprep.subr.mxu0 0.0
  %308 = vmatpush1.msra.mxu0 0.0
  %309 = vmatprep.subr.mxu0 0.0
  %310 = vmatpush1.msra.mxu0 0.0
  %311 = vmatprep.subr.mxu0 0.0
  %312 = vmatpush1.msra.mxu0 0.0
  %313 = vmatprep.subr.mxu0 0.0
  %314 = vmatpush1.msra.mxu0 0.0
  %315 = vmatprep.subr.mxu0 0.0
  %316 = vmatpush1.msra.mxu0 0.0
  %317 = vmatprep.subr.mxu0 0.0
  %318 = vmatpush1.msra.mxu0 0.0
  %319 = vmatprep.subr.mxu0 0.0
  %320 = vmatpush1.msra.mxu0 0.0
  %321 = vmatprep.subr.mxu0 0.0
  %322 = vmatpush1.msra.mxu0 0.0
  %323 = vmatprep.subr.mxu0 0.0
  %324 = vmatpush1.msra.mxu0 0.0
  %325 = vmatprep.subr.mxu0 0.0
  %326 = vmatpush1.msra.mxu0 0.0
  %327 = vmatprep.subr.mxu0 0.0
  %328 = vmatpush1.msra.mxu0 0.0
  %329 = vmatprep.subr.mxu0 0.0
  %330 = vmatpush1.msra.mxu0 0.0
  %331 = vmatprep.subr.mxu0 0.0
  %332 = vmatpush1.msra.mxu0 0.0
  %333 = vmatprep.subr.mxu0 0.0
  %334 = vmatpush1.msra.mxu0 0.0
  %335 = vmatprep.subr.mxu0 0.0
  %336 = vmatpush1.msra.mxu0 0.0
  %337 = vmatprep.subr.mxu0 0.0
  %338 = vmatpush1.msra.mxu0 0.0
  %339 = vmatprep.subr.mxu0 0.0
  %340 = vmatpush1.msra.mxu0 0.0
  %341 = vmatprep.mubr.f32.mxu0 0.0
  %342 = vmatmul.mubr.f32.gmra.mrb[0].mxu0 %v275
  %v343 = vpop.f32.mrb[0].mxu0
  %v344 = vadd.f32 %v46, %v343
  %v345 = vpop.f32.mrb[0].mxu0
  %346 = vdwg.mxu0
  %s347 = scalar_lea.vmem %s0, 32
  %v348 = vld [vmem:[%s347] sm:$0xff]
  %v350 = vsel %vm48, %v348, 0
  %352 = vmatprep.subr.mxu0 0.0
  %353 = vmatpush1.msra.mxu0 %v38
  %354 = vmatprep.subr.mxu0 0.0
  %355 = vmatpush1.msra.mxu0 %v39
  %356 = vmatprep.subr.mxu0 0.0
  %357 = vmatpush1.msra.mxu0 0.0
  %358 = vmatprep.subr.mxu0 0.0
  %359 = vmatpush1.msra.mxu0 0.0
  %360 = vmatprep.subr.mxu0 0.0
  %361 = vmatpush1.msra.mxu0 0.0
  %362 = vmatprep.subr.mxu0 0.0
  %363 = vmatpush1.msra.mxu0 0.0
  %364 = vmatprep.subr.mxu0 0.0
  %365 = vmatpush1.msra.mxu0 0.0
  %366 = vmatprep.subr.mxu0 0.0
  %367 = vmatpush1.msra.mxu0 0.0
  %368 = vmatprep.subr.mxu0 0.0
  %369 = vmatpush1.msra.mxu0 0.0
  %370 = vmatprep.subr.mxu0 0.0
  %371 = vmatpush1.msra.mxu0 0.0
  %372 = vmatprep.subr.mxu0 0.0
  %373 = vmatpush1.msra.mxu0 0.0
  %374 = vmatprep.subr.mxu0 0.0
  %375 = vmatpush1.msra.mxu0 0.0
  %376 = vmatprep.subr.mxu0 0.0
  %377 = vmatpush1.msra.mxu0 0.0
  %378 = vmatprep.subr.mxu0 0.0
  %379 = vmatpush1.msra.mxu0 0.0
  %380 = vmatprep.subr.mxu0 0.0
  %381 = vmatpush1.msra.mxu0 0.0
  %382 = vmatprep.subr.mxu0 0.0
  %383 = vmatpush1.msra.mxu0 0.0
  %384 = vmatprep.subr.mxu0 0.0
  %385 = vmatpush1.msra.mxu0 0.0
  %386 = vmatprep.subr.mxu0 0.0
  %387 = vmatpush1.msra.mxu0 0.0
  %388 = vmatprep.subr.mxu0 0.0
  %389 = vmatpush1.msra.mxu0 0.0
  %390 = vmatprep.subr.mxu0 0.0
  %391 = vmatpush1.msra.mxu0 0.0
  %392 = vmatprep.subr.mxu0 0.0
  %393 = vmatpush1.msra.mxu0 0.0
  %394 = vmatprep.subr.mxu0 0.0
  %395 = vmatpush1.msra.mxu0 0.0
  %396 = vmatprep.subr.mxu0 0.0
  %397 = vmatpush1.msra.mxu0 0.0
  %398 = vmatprep.subr.mxu0 0.0
  %399 = vmatpush1.msra.mxu0 0.0
  %400 = vmatprep.subr.mxu0 0.0
  %401 = vmatpush1.msra.mxu0 0.0
  %402 = vmatprep.subr.mxu0 0.0
  %403 = vmatpush1.msra.mxu0 0.0
  %404 = vmatprep.subr.mxu0 0.0
  %405 = vmatpush1.msra.mxu0 0.0
  %406 = vmatprep.subr.mxu0 0.0
  %407 = vmatpush1.msra.mxu0 0.0
  %408 = vmatprep.subr.mxu0 0.0
  %409 = vmatpush1.msra.mxu0 0.0
  %410 = vmatprep.subr.mxu0 0.0
  %411 = vmatpush1.msra.mxu0 0.0
  %412 = vmatprep.subr.mxu0 0.0
  %413 = vmatpush1.msra.mxu0 0.0
  %414 = vmatprep.subr.mxu0 0.0
  %415 = vmatpush1.msra.mxu0 0.0
  %416 = vmatprep.mubr.f32.mxu0 0.0
  %417 = vmatmul.mubr.f32.gmra.mrb[0].mxu0 %v350
  %v418 = vpop.f32.mrb[0].mxu0
  %v419 = vadd.f32 %v46, %v418
  %v420 = vpop.f32.mrb[0].mxu0
  %421 = vdwg.mxu0
  %v422 = vld [vmem:[%s3] sm:$0x1]
  %v423 = vlaneseq
  %v424 = vshrl.u32 %v423, 7
  %v425 = vsub.s32 0, %v424
  %v426 = vrot.slane %v422, %v425
  %v427 = vmul.f32 %v426, 0.0
  %v428 = vld [vmem:[%s4] sm:$0x1]
  %v429 = vlaneseq
  %v430 = vshrl.u32 %v429, 7
  %v431 = vsub.s32 0, %v430
  %v432 = vrot.slane %v428, %v431
  %v433 = vadd.f32 %v119, %v432
  %v434 = vadd.f32 %v427, %v433
  %vm435 = vcmp.gt.f32.partialorder %v434, 2.0
  %v436 = vsel %vm435, 1, 0
  %v437 = vcvt.s32.f32 %v436
  %v438 = vadd.f32 %v437, 0.0
  %v439 = vld [vmem:[%s3 + $0x1] sm:$0x1]
  %v440 = vlaneseq
  %v441 = vshrl.u32 %v440, 7
  %v442 = vsub.s32 0, %v441
  %v443 = vrot.slane %v439, %v442
  %v444 = vmul.f32 %v434, %v443
  %v445 = vld [vmem:[%s4 + $0x1] sm:$0x1]
  %v446 = vlaneseq
  %v447 = vshrl.u32 %v446, 7
  %v448 = vsub.s32 0, %v447
  %v449 = vrot.slane %v445, %v448
  %v450 = vadd.f32 %v119, %v449
  %v451 = vadd.f32 %v444, %v450
  %vm452 = vcmp.gt.f32.partialorder %v451, 2.0
  %v453 = vsel %vm452, 1, 0
  %v454 = vcvt.s32.f32 %v453
  %v455 = vadd.f32 %v438, %v454
  %v456 = vld [vmem:[%s3 + $0x2] sm:$0x1]
  %v457 = vlaneseq
  %v458 = vshrl.u32 %v457, 7
  %v459 = vsub.s32 0, %v458
  %v460 = vrot.slane %v456, %v459
  %v461 = vmul.f32 %v451, %v460
  %v462 = vld [vmem:[%s4 + $0x2] sm:$0x1]
  %v463 = vlaneseq
  %v464 = vshrl.u32 %v463, 7
  %v465 = vsub.s32 0, %v464
  %v466 = vrot.slane %v462, %v465
  %v467 = vadd.f32 %v119, %v466
  %v468 = vadd.f32 %v461, %v467
  %vm469 = vcmp.gt.f32.partialorder %v468, 2.0
  %v470 = vsel %vm469, 1, 0
  %v471 = vcvt.s32.f32 %v470
  %v472 = vadd.f32 %v455, %v471
  %v473 = vld [vmem:[%s3 + $0x3] sm:$0x1]
  %v474 = vlaneseq
  %v475 = vshrl.u32 %v474, 7
  %v476 = vsub.s32 0, %v475
  %v477 = vrot.slane %v473, %v476
  %v478 = vmul.f32 %v468, %v477
  %v479 = vld [vmem:[%s4 + $0x3] sm:$0x1]
  %v480 = vlaneseq
  %v481 = vshrl.u32 %v480, 7
  %v482 = vsub.s32 0, %v481
  %v483 = vrot.slane %v479, %v482
  %v484 = vadd.f32 %v194, %v483
  %v485 = vadd.f32 %v478, %v484
  %vm486 = vcmp.gt.f32.partialorder %v485, 2.0
  %v487 = vsel %vm486, 1, 0
  %v488 = vcvt.s32.f32 %v487
  %v489 = vadd.f32 %v472, %v488
  %v490 = vld [vmem:[%s3 + $0x4] sm:$0x1]
  %v491 = vlaneseq
  %v492 = vshrl.u32 %v491, 7
  %v493 = vsub.s32 0, %v492
  %v494 = vrot.slane %v490, %v493
  %v495 = vmul.f32 %v485, %v494
  %v496 = vld [vmem:[%s4 + $0x4] sm:$0x1]
  %v497 = vlaneseq
  %v498 = vshrl.u32 %v497, 7
  %v499 = vsub.s32 0, %v498
  %v500 = vrot.slane %v496, %v499
  %v501 = vadd.f32 %v194, %v500
  %v502 = vadd.f32 %v495, %v501
  %vm503 = vcmp.gt.f32.partialorder %v502, 2.0
  %v504 = vsel %vm503, 1, 0
  %v505 = vcvt.s32.f32 %v504
  %v506 = vadd.f32 %v489, %v505
  %v507 = vld [vmem:[%s3 + $0x5] sm:$0x1]
  %v508 = vlaneseq
  %v509 = vshrl.u32 %v508, 7
  %v510 = vsub.s32 0, %v509
  %v511 = vrot.slane %v507, %v510
  %v512 = vmul.f32 %v502, %v511
  %v513 = vld [vmem:[%s4 + $0x5] sm:$0x1]
  %v514 = vlaneseq
  %v515 = vshrl.u32 %v514, 7
  %v516 = vsub.s32 0, %v515
  %v517 = vrot.slane %v513, %v516
  %v518 = vadd.f32 %v194, %v517
  %v519 = vadd.f32 %v512, %v518
  %vm520 = vcmp.gt.f32.partialorder %v519, 2.0
  %v521 = vsel %vm520, 1, 0
  %v522 = vcvt.s32.f32 %v521
  %v523 = vadd.f32 %v506, %v522
  %v524 = vld [vmem:[%s3 + $0x6] sm:$0x1]
  %v525 = vlaneseq
  %v526 = vshrl.u32 %v525, 7
  %v527 = vsub.s32 0, %v526
  %v528 = vrot.slane %v524, %v527
  %v529 = vmul.f32 %v519, %v528
  %v530 = vld [vmem:[%s4 + $0x6] sm:$0x1]
  %v531 = vlaneseq
  %v532 = vshrl.u32 %v531, 7
  %v533 = vsub.s32 0, %v532
  %v534 = vrot.slane %v530, %v533
  %v535 = vadd.f32 %v269, %v534
  %v536 = vadd.f32 %v529, %v535
  %vm537 = vcmp.gt.f32.partialorder %v536, 2.0
  %v538 = vsel %vm537, 1, 0
  %v539 = vcvt.s32.f32 %v538
  %v540 = vadd.f32 %v523, %v539
  %v541 = vld [vmem:[%s3 + $0x7] sm:$0x1]
  %v542 = vlaneseq
  %v543 = vshrl.u32 %v542, 7
  %v544 = vsub.s32 0, %v543
  %v545 = vrot.slane %v541, %v544
  %v546 = vmul.f32 %v536, %v545
  %v547 = vld [vmem:[%s4 + $0x7] sm:$0x1]
  %v548 = vlaneseq
  %v549 = vshrl.u32 %v548, 7
  %v550 = vsub.s32 0, %v549
  %v551 = vrot.slane %v547, %v550
  %v552 = vadd.f32 %v269, %v551
  %v553 = vadd.f32 %v546, %v552
  %vm554 = vcmp.gt.f32.partialorder %v553, 2.0
  %v555 = vsel %vm554, 1, 0
  %v556 = vcvt.s32.f32 %v555
  %v557 = vadd.f32 %v540, %v556
  %v558 = vld [vmem:[%s3 + $0x8] sm:$0x1]
  %v559 = vlaneseq
  %v560 = vshrl.u32 %v559, 7
  %v561 = vsub.s32 0, %v560
  %v562 = vrot.slane %v558, %v561
  %v563 = vmul.f32 %v553, %v562
  %v564 = vld [vmem:[%s4 + $0x8] sm:$0x1]
  %v565 = vlaneseq
  %v566 = vshrl.u32 %v565, 7
  %v567 = vsub.s32 0, %v566
  %v568 = vrot.slane %v564, %v567
  %v569 = vadd.f32 %v269, %v568
  %v570 = vadd.f32 %v563, %v569
  %vm571 = vcmp.gt.f32.partialorder %v570, 2.0
  %v572 = vsel %vm571, 1, 0
  %v573 = vcvt.s32.f32 %v572
  %v574 = vadd.f32 %v557, %v573
  %v575 = vld [vmem:[%s3 + $0x9] sm:$0x1]
  %v576 = vlaneseq
  %v577 = vshrl.u32 %v576, 7
  %v578 = vsub.s32 0, %v577
  %v579 = vrot.slane %v575, %v578
  %v580 = vmul.f32 %v570, %v579
  %v581 = vld [vmem:[%s4 + $0x9] sm:$0x1]
  %v582 = vlaneseq
  %v583 = vshrl.u32 %v582, 7
  %v584 = vsub.s32 0, %v583
  %v585 = vrot.slane %v581, %v584
  %v586 = vadd.f32 %v344, %v585
  %v587 = vadd.f32 %v580, %v586
  %vm588 = vcmp.gt.f32.partialorder %v587, 2.0
  %v589 = vsel %vm588, 1, 0
  %v590 = vcvt.s32.f32 %v589
  %v591 = vadd.f32 %v574, %v590
  %v592 = vld [vmem:[%s3 + $0xa] sm:$0x1]
  %v593 = vlaneseq
  %v594 = vshrl.u32 %v593, 7
  %v595 = vsub.s32 0, %v594
  %v596 = vrot.slane %v592, %v595
  %v597 = vmul.f32 %v587, %v596
  %v598 = vld [vmem:[%s4 + $0xa] sm:$0x1]
  %v599 = vlaneseq
  %v600 = vshrl.u32 %v599, 7
  %v601 = vsub.s32 0, %v600
  %v602 = vrot.slane %v598, %v601
  %v603 = vadd.f32 %v344, %v602
  %v604 = vadd.f32 %v597, %v603
  %vm605 = vcmp.gt.f32.partialorder %v604, 2.0
  %v606 = vsel %vm605, 1, 0
  %v607 = vcvt.s32.f32 %v606
  %v608 = vadd.f32 %v591, %v607
  %v609 = vld [vmem:[%s3 + $0xb] sm:$0x1]
  %v610 = vlaneseq
  %v611 = vshrl.u32 %v610, 7
  %v612 = vsub.s32 0, %v611
  %v613 = vrot.slane %v609, %v612
  %v614 = vmul.f32 %v604, %v613
  %v615 = vld [vmem:[%s4 + $0xb] sm:$0x1]
  %v616 = vlaneseq
  %v617 = vshrl.u32 %v616, 7
  %v618 = vsub.s32 0, %v617
  %v619 = vrot.slane %v615, %v618
  %v620 = vadd.f32 %v344, %v619
  %v621 = vadd.f32 %v614, %v620
  %vm622 = vcmp.gt.f32.partialorder %v621, 2.0
  %v623 = vsel %vm622, 1, 0
  %v624 = vcvt.s32.f32 %v623
  %v625 = vadd.f32 %v608, %v624
  %v626 = vld [vmem:[%s3 + $0xc] sm:$0x1]
  %v627 = vlaneseq
  %v628 = vshrl.u32 %v627, 7
  %v629 = vsub.s32 0, %v628
  %v630 = vrot.slane %v626, %v629
  %v631 = vmul.f32 %v621, %v630
  %v632 = vld [vmem:[%s4 + $0xc] sm:$0x1]
  %v633 = vlaneseq
  %v634 = vshrl.u32 %v633, 7
  %v635 = vsub.s32 0, %v634
  %v636 = vrot.slane %v632, %v635
  %v637 = vadd.f32 %v419, %v636
  %v638 = vadd.f32 %v631, %v637
  %vm639 = vcmp.gt.f32.partialorder %v638, 2.0
  %v640 = vsel %vm639, 1, 0
  %v641 = vcvt.s32.f32 %v640
  %v642 = vadd.f32 %v625, %v641
  %v643 = vld [vmem:[%s3 + $0xd] sm:$0x1]
  %v644 = vlaneseq
  %v645 = vshrl.u32 %v644, 7
  %v646 = vsub.s32 0, %v645
  %v647 = vrot.slane %v643, %v646
  %v648 = vmul.f32 %v638, %v647
  %v649 = vld [vmem:[%s4 + $0xd] sm:$0x1]
  %v650 = vlaneseq
  %v651 = vshrl.u32 %v650, 7
  %v652 = vsub.s32 0, %v651
  %v653 = vrot.slane %v649, %v652
  %v654 = vadd.f32 %v419, %v653
  %v655 = vadd.f32 %v648, %v654
  %vm656 = vcmp.gt.f32.partialorder %v655, 2.0
  %v657 = vsel %vm656, 1, 0
  %v658 = vcvt.s32.f32 %v657
  %v659 = vadd.f32 %v642, %v658
  %v660 = vld [vmem:[%s3 + $0xe] sm:$0x1]
  %v661 = vlaneseq
  %v662 = vshrl.u32 %v661, 7
  %v663 = vsub.s32 0, %v662
  %v664 = vrot.slane %v660, %v663
  %v665 = vmul.f32 %v655, %v664
  %v666 = vld [vmem:[%s4 + $0xe] sm:$0x1]
  %v667 = vlaneseq
  %v668 = vshrl.u32 %v667, 7
  %v669 = vsub.s32 0, %v668
  %v670 = vrot.slane %v666, %v669
  %v671 = vadd.f32 %v419, %v670
  %v672 = vadd.f32 %v665, %v671
  %vm673 = vcmp.gt.f32.partialorder %v672, 2.0
  %v674 = vsel %vm673, 1, 0
  %v675 = vcvt.s32.f32 %v674
  %v676 = vadd.f32 %v659, %v675
  %v677 = vld [vmem:[%s5] sm:$0xff]
  %v678 = vld [vmem:[%s5 + $0x8] sm:$0xff]
  %v679 = vld [vmem:[%s5 + $0x10] sm:$0xff]
  %v680 = vld [vmem:[%s5 + $0x18] sm:$0xff]
  %v681 = vld [vmem:[%s6] sm:$0x1]
  %v683 = vlaneseq
  %v684 = vshrl.u32 %v683, 7
  %v685 = vsub.s32 0, %v684
  %v686 = vrot.slane %v681, %v685
  %vm688 = vcmask 261120
  %v690 = vsel %vm688, %v676, 0
  %692 = vmatprep.subr.mxu0 0.0
  %693 = vmatpush1.msra.mxu0 %v677
  %694 = vmatprep.subr.mxu0 0.0
  %695 = vmatpush1.msra.mxu0 %v678
  %696 = vmatprep.subr.mxu0 0.0
  %697 = vmatpush1.msra.mxu0 %v679
  %698 = vmatprep.subr.mxu0 0.0
  %699 = vmatpush1.msra.mxu0 %v680
  %700 = vmatprep.subr.mxu0 0.0
  %701 = vmatpush1.msra.mxu0 0.0
  %702 = vmatprep.subr.mxu0 0.0
  %703 = vmatpush1.msra.mxu0 0.0
  %704 = vmatprep.subr.mxu0 0.0
  %705 = vmatpush1.msra.mxu0 0.0
  %706 = vmatprep.subr.mxu0 0.0
  %707 = vmatpush1.msra.mxu0 0.0
  %708 = vmatprep.subr.mxu0 0.0
  %709 = vmatpush1.msra.mxu0 0.0
  %710 = vmatprep.subr.mxu0 0.0
  %711 = vmatpush1.msra.mxu0 0.0
  %712 = vmatprep.subr.mxu0 0.0
  %713 = vmatpush1.msra.mxu0 0.0
  %714 = vmatprep.subr.mxu0 0.0
  %715 = vmatpush1.msra.mxu0 0.0
  %716 = vmatprep.subr.mxu0 0.0
  %717 = vmatpush1.msra.mxu0 0.0
  %718 = vmatprep.subr.mxu0 0.0
  %719 = vmatpush1.msra.mxu0 0.0
  %720 = vmatprep.subr.mxu0 0.0
  %721 = vmatpush1.msra.mxu0 0.0
  %722 = vmatprep.subr.mxu0 0.0
  %723 = vmatpush1.msra.mxu0 0.0
  %724 = vmatprep.subr.mxu0 0.0
  %725 = vmatpush1.msra.mxu0 0.0
  %726 = vmatprep.subr.mxu0 0.0
  %727 = vmatpush1.msra.mxu0 0.0
  %728 = vmatprep.subr.mxu0 0.0
  %729 = vmatpush1.msra.mxu0 0.0
  %730 = vmatprep.subr.mxu0 0.0
  %731 = vmatpush1.msra.mxu0 0.0
  %732 = vmatprep.subr.mxu0 0.0
  %733 = vmatpush1.msra.mxu0 0.0
  %734 = vmatprep.subr.mxu0 0.0
  %735 = vmatpush1.msra.mxu0 0.0
  %736 = vmatprep.subr.mxu0 0.0
  %737 = vmatpush1.msra.mxu0 0.0
  %738 = vmatprep.subr.mxu0 0.0
  %739 = vmatpush1.msra.mxu0 0.0
  %740 = vmatprep.subr.mxu0 0.0
  %741 = vmatpush1.msra.mxu0 0.0
  %742 = vmatprep.subr.mxu0 0.0
  %743 = vmatpush1.msra.mxu0 0.0
  %744 = vmatprep.subr.mxu0 0.0
  %745 = vmatpush1.msra.mxu0 0.0
  %746 = vmatprep.subr.mxu0 0.0
  %747 = vmatpush1.msra.mxu0 0.0
  %748 = vmatprep.subr.mxu0 0.0
  %749 = vmatpush1.msra.mxu0 0.0
  %750 = vmatprep.subr.mxu0 0.0
  %751 = vmatpush1.msra.mxu0 0.0
  %752 = vmatprep.subr.mxu0 0.0
  %753 = vmatpush1.msra.mxu0 0.0
  %754 = vmatprep.subr.mxu0 0.0
  %755 = vmatpush1.msra.mxu0 0.0
  %756 = vmatprep.mubr.f32.mxu0 0.0
  %757 = vmatmul.mubr.f32.gmra.mrb[0].mxu0 %v690
  %v758 = vpop.f32.mrb[0].mxu0
  %v759 = vadd.f32 %v686, %v758
  %v760 = vpop.f32.mrb[0].mxu0
  %761 = vdwg.mxu0
  %v762 = vmax.f32 %v759, 0.0
  %v763 = vld [vmem:[%s7] sm:$0xff]
  %v764 = vld [vmem:[%s7 + $0x8] sm:$0xff]
  %v765 = vld [vmem:[%s7 + $0x10] sm:$0xff]
  %v766 = vld [vmem:[%s7 + $0x18] sm:$0xff]
  %v767 = vld [vmem:[%s7 + $0x20] sm:$0xff]
  %v768 = vld [vmem:[%s7 + $0x28] sm:$0xff]
  %v769 = vld [vmem:[%s7 + $0x30] sm:$0xff]
  %v770 = vld [vmem:[%s7 + $0x38] sm:$0xff]
  %v771 = vld [vmem:[%s8] sm:$0x1]
  %v773 = vlaneseq
  %v774 = vshrl.u32 %v773, 7
  %v775 = vsub.s32 0, %v774
  %v776 = vrot.slane %v771, %v775
  %vm778 = vcmask 523264
  %v780 = vsel %vm778, %v762, 0
  %782 = vmatprep.subr.mxu0 0.0
  %783 = vmatpush1.msra.mxu0 %v763
  %784 = vmatprep.subr.mxu0 0.0
  %785 = vmatpush1.msra.mxu0 %v764
  %786 = vmatprep.subr.mxu0 0.0
  %787 = vmatpush1.msra.mxu0 %v765
  %788 = vmatprep.subr.mxu0 0.0
  %789 = vmatpush1.msra.mxu0 %v766
  %790 = vmatprep.subr.mxu0 0.0
  %791 = vmatpush1.msra.mxu0 %v767
  %792 = vmatprep.subr.mxu0 0.0
  %793 = vmatpush1.msra.mxu0 %v768
  %794 = vmatprep.subr.mxu0 0.0
  %795 = vmatpush1.msra.mxu0 %v769
  %796 = vmatprep.subr.mxu0 0.0
  %797 = vmatpush1.msra.mxu0 %v770
  %798 = vmatprep.subr.mxu0 0.0
  %799 = vmatpush1.msra.mxu0 0.0
  %800 = vmatprep.subr.mxu0 0.0
  %801 = vmatpush1.msra.mxu0 0.0
  %802 = vmatprep.subr.mxu0 0.0
  %803 = vmatpush1.msra.mxu0 0.0
  %804 = vmatprep.subr.mxu0 0.0
  %805 = vmatpush1.msra.mxu0 0.0
  %806 = vmatprep.subr.mxu0 0.0
  %807 = vmatpush1.msra.mxu0 0.0
  %808 = vmatprep.subr.mxu0 0.0
  %809 = vmatpush1.msra.mxu0 0.0
  %810 = vmatprep.subr.mxu0 0.0
  %811 = vmatpush1.msra.mxu0 0.0
  %812 = vmatprep.subr.mxu0 0.0
  %813 = vmatpush1.msra.mxu0 0.0
  %814 = vmatprep.subr.mxu0 0.0
  %815 = vmatpush1.msra.mxu0 0.0
  %816 = vmatprep.subr.mxu0 0.0
  %817 = vmatpush1.msra.mxu0 0.0
  %818 = vmatprep.subr.mxu0 0.0
  %819 = vmatpush1.msra.mxu0 0.0
  %820 = vmatprep.subr.mxu0 0.0
  %821 = vmatpush1.msra.mxu0 0.0
  %822 = vmatprep.subr.mxu0 0.0
  %823 = vmatpush1.msra.mxu0 0.0
  %824 = vmatprep.subr.mxu0 0.0
  %825 = vmatpush1.msra.mxu0 0.0
  %826 = vmatprep.subr.mxu0 0.0
  %827 = vmatpush1.msra.mxu0 0.0
  %828 = vmatprep.subr.mxu0 0.0
  %829 = vmatpush1.msra.mxu0 0.0
  %830 = vmatprep.subr.mxu0 0.0
  %831 = vmatpush1.msra.mxu0 0.0
  %832 = vmatprep.subr.mxu0 0.0
  %833 = vmatpush1.msra.mxu0 0.0
  %834 = vmatprep.subr.mxu0 0.0
  %835 = vmatpush1.msra.mxu0 0.0
  %836 = vmatprep.subr.mxu0 0.0
  %837 = vmatpush1.msra.mxu0 0.0
  %838 = vmatprep.subr.mxu0 0.0
  %839 = vmatpush1.msra.mxu0 0.0
  %840 = vmatprep.subr.mxu0 0.0
  %841 = vmatpush1.msra.mxu0 0.0
  %842 = vmatprep.subr.mxu0 0.0
  %843 = vmatpush1.msra.mxu0 0.0
  %844 = vmatprep.subr.mxu0 0.0
  %845 = vmatpush1.msra.mxu0 0.0
  %846 = vmatprep.mubr.f32.mxu0 0.0
  %847 = vmatmul.mubr.f32.gmra.mrb[0].mxu0 %v780
  %v848 = vpop.f32.mrb[0].mxu0
  %v849 = vadd.f32 %v776, %v848
  %v850 = vpop.f32.mrb[0].mxu0
  %851 = vdwg.mxu0
  %v852 = vmax.f32 %v849, 0.0
  %v853 = vld [vmem:[%s9] sm:$0xff]
  %v854 = vld [vmem:[%s9 + $0x8] sm:$0xff]
  %v855 = vld [vmem:[%s9 + $0x10] sm:$0xff]
  %v856 = vld [vmem:[%s9 + $0x18] sm:$0xff]
  %v857 = vld [vmem:[%s9 + $0x20] sm:$0xff]
  %v858 = vld [vmem:[%s9 + $0x28] sm:$0xff]
  %v859 = vld [vmem:[%s9 + $0x30] sm:$0xff]
  %v860 = vld [vmem:[%s9 + $0x38] sm:$0xff]
  %v861 = vld [vmem:[%s10] sm:$0x1]
  %v863 = vlaneseq
  %v864 = vshrl.u32 %v863, 7
  %v865 = vsub.s32 0, %v864
  %v866 = vrot.slane %v861, %v865
  %v869 = vsel %vm778, %v852, 0
  %871 = vmatprep.subr.mxu0 0.0
  %872 = vmatpush1.msra.mxu0 %v853
  %873 = vmatprep.subr.mxu0 0.0
  %874 = vmatpush1.msra.mxu0 %v854
  %875 = vmatprep.subr.mxu0 0.0
  %876 = vmatpush1.msra.mxu0 %v855
  %877 = vmatprep.subr.mxu0 0.0
  %878 = vmatpush1.msra.mxu0 %v856
  %879 = vmatprep.subr.mxu0 0.0
  %880 = vmatpush1.msra.mxu0 %v857
  %881 = vmatprep.subr.mxu0 0.0
  %882 = vmatpush1.msra.mxu0 %v858
  %883 = vmatprep.subr.mxu0 0.0
  %884 = vmatpush1.msra.mxu0 %v859
  %885 = vmatprep.subr.mxu0 0.0
  %886 = vmatpush1.msra.mxu0 %v860
  %887 = vmatprep.subr.mxu0 0.0
  %888 = vmatpush1.msra.mxu0 0.0
  %889 = vmatprep.subr.mxu0 0.0
  %890 = vmatpush1.msra.mxu0 0.0
  %891 = vmatprep.subr.mxu0 0.0
  %892 = vmatpush1.msra.mxu0 0.0
  %893 = vmatprep.subr.mxu0 0.0
  %894 = vmatpush1.msra.mxu0 0.0
  %895 = vmatprep.subr.mxu0 0.0
  %896 = vmatpush1.msra.mxu0 0.0
  %897 = vmatprep.subr.mxu0 0.0
  %898 = vmatpush1.msra.mxu0 0.0
  %899 = vmatprep.subr.mxu0 0.0
  %900 = vmatpush1.msra.mxu0 0.0
  %901 = vmatprep.subr.mxu0 0.0
  %902 = vmatpush1.msra.mxu0 0.0
  %903 = vmatprep.subr.mxu0 0.0
  %904 = vmatpush1.msra.mxu0 0.0
  %905 = vmatprep.subr.mxu0 0.0
  %906 = vmatpush1.msra.mxu0 0.0
  %907 = vmatprep.subr.mxu0 0.0
  %908 = vmatpush1.msra.mxu0 0.0
  %909 = vmatprep.subr.mxu0 0.0
  %910 = vmatpush1.msra.mxu0 0.0
  %911 = vmatprep.subr.mxu0 0.0
  %912 = vmatpush1.msra.mxu0 0.0
  %913 = vmatprep.subr.mxu0 0.0
  %914 = vmatpush1.msra.mxu0 0.0
  %915 = vmatprep.subr.mxu0 0.0
  %916 = vmatpush1.msra.mxu0 0.0
  %917 = vmatprep.subr.mxu0 0.0
  %918 = vmatpush1.msra.mxu0 0.0
  %919 = vmatprep.subr.mxu0 0.0
  %920 = vmatpush1.msra.mxu0 0.0
  %921 = vmatprep.subr.mxu0 0.0
  %922 = vmatpush1.msra.mxu0 0.0
  %923 = vmatprep.subr.mxu0 0.0
  %924 = vmatpush1.msra.mxu0 0.0
  %925 = vmatprep.subr.mxu0 0.0
  %926 = vmatpush1.msra.mxu0 0.0
  %927 = vmatprep.subr.mxu0 0.0
  %928 = vmatpush1.msra.mxu0 0.0
  %929 = vmatprep.subr.mxu0 0.0
  %930 = vmatpush1.msra.mxu0 0.0
  %931 = vmatprep.subr.mxu0 0.0
  %932 = vmatpush1.msra.mxu0 0.0
  %933 = vmatprep.subr.mxu0 0.0
  %934 = vmatpush1.msra.mxu0 0.0
  %935 = vmatprep.mubr.f32.mxu0 0.0
  %936 = vmatmul.mubr.f32.gmra.mrb[0].mxu0 %v869
  %v937 = vpop.f32.mrb[0].mxu0
  %v938 = vadd.f32 %v866, %v937
  %v939 = vpop.f32.mrb[0].mxu0
  %940 = vdwg.mxu0
  %941 = vst [vmem:[%s11] sm:$0xff] %v938
  // Predicated region
  $region46: #{gaussian_policy_forward.1} parent=0 // pred_check
    _
  $region47: #{gaussian_policy_forward.1} parent=0 // pred_check_branch
    %943 = sbr.rel (0) target = $region49
  $region48: #{gaussian_policy_forward.1} parent=0 // pred_region
    _
  $region49: #{gaussian_policy_forward.1} parent=0 // pred_fallthru
    _
  // Predicated region
  $region50: #{gaussian_policy_forward.1} parent=0 // pred_check
    _
  $region51: #{gaussian_policy_forward.1} parent=0 // pred_check_branch
    %945 = sbr.rel (0) target = $region53
  $region52: #{gaussian_policy_forward.1} parent=0 // pred_region
    _
  $region53: #{gaussian_policy_forward.1} parent=0 // pred_fallthru
    _

</llo_original>
